<compile_context>
chip_gen: v5e
topology: v5e:2x2
jax: 0.10.0
libtpu: 0.0.40
codegen_flags: <defaults>
</compile_context>

<pallas_src>
import functools

import jax
import jax.numpy as jnp
from jax.experimental import pallas as pl
from jax.experimental.pallas import tpu as pltpu


def _attention_pool_kernel(x_ref, pos0_ref, posr_ref, hm_ref, hmt_ref,
                           qw_ref, qb_ref, kw_ref, kb_ref, vw_ref, vb_ref,
                           cw_ref, cb_ref, out_ref, *, num_heads, compute_dtype):
    B, L, C = x_ref.shape

    x = x_ref[...].astype(jnp.float32)                          # (B, L, C)

    # Mean token + positional embedding, handled as a separate row (no concat).
    mean_tok = jnp.mean(x, axis=1) + pos0_ref[...]              # (B, C)
    x_tok = x + posr_ref[...][None, :, :]                       # (B, L, C)

    # Flatten tokens of all B_TILE batch elements into one big MXU matmul.
    xt = x_tok.reshape(B * L, C).astype(compute_dtype)          # (B*L, C)
    mt = mean_tok.astype(compute_dtype)                         # (B, C)

    # Projections (weights pre-transposed to (in, out); scale folded into q).
    q = jnp.dot(mt, qw_ref[...], preferred_element_type=jnp.float32) + qb_ref[...]
    k_m = jnp.dot(mt, kw_ref[...], preferred_element_type=jnp.float32) + kb_ref[...]
    v_m = jnp.dot(mt, vw_ref[...], preferred_element_type=jnp.float32) + vb_ref[...]
    k_x = (jnp.dot(xt, kw_ref[...], preferred_element_type=jnp.float32)
           + kb_ref[...]).reshape(B, L, C)
    v_x = (jnp.dot(xt, vw_ref[...], preferred_element_type=jnp.float32)
           + vb_ref[...]).reshape(B, L, C)

    # Fused all-head scores for the single pooled query:
    #   s[b, l, h] = sum_d q[b, h, d] * k[b, l, h, d]
    # done for all heads at once via the 0/1 head-membership matrix hm (C, H).
    s_x = jnp.dot((q[:, None, :] * k_x).reshape(B * L, C), hm_ref[...],
                  preferred_element_type=jnp.float32).reshape(B, L, num_heads)
    s_m = jnp.dot(q * k_m, hm_ref[...],
                  preferred_element_type=jnp.float32)           # (B, H)

    # Numerically-stable softmax over the (L+1) keys, all heads jointly (f32).
    m = jnp.maximum(jnp.max(s_x, axis=1), s_m)                  # (B, H)
    p_x = jnp.exp(s_x - m[:, None, :])                          # (B, L, H)
    p_m = jnp.exp(s_m - m)                                      # (B, H)
    denom = jnp.sum(p_x, axis=1) + p_m                          # (B, H)
    approx = jnp.dtype(compute_dtype) != jnp.dtype(jnp.float32)
    inv = pl.reciprocal(denom, approx=approx)                   # EUP slot
    p_x = p_x * inv[:, None, :]
    p_m = p_m * inv

    # Broadcast per-head probabilities back across head_dim lanes (hm^T) and
    # take the weighted value sum.
    w_x = jnp.dot(p_x.reshape(B * L, num_heads), hmt_ref[...],
                  preferred_element_type=jnp.float32).reshape(B, L, C)
    w_m = jnp.dot(p_m, hmt_ref[...], preferred_element_type=jnp.float32)
    attn = jnp.sum(w_x * v_x, axis=1) + w_m * v_m               # (B, C)

    out = jnp.dot(attn.astype(compute_dtype), cw_ref[...],
                  preferred_element_type=jnp.float32) + cb_ref[...]  # (B, Dout)
    out_ref[...] = out.astype(out_ref.dtype)


def _pick_b_tile(n, l):
    """Divisor of n with 8-aligned sublanes (or == n), targeting >=256 token
    rows per projection matmul."""
    divs = [d for d in range(1, n + 1) if n % d == 0]
    valid = [d for d in divs if d == n or d % 8 == 0]
    for d in valid:
        if d * (l + 1) >= 256:
            return d
    return valid[-1]


def attention_pool_2d(x_nchw, params, num_heads, *, b_tile=None,
                      compute_dtype=jnp.bfloat16):
    """x_nchw: (N, C, H, W) -> (N, output_dim)."""
    N, C, H, W = x_nchw.shape
    L = H * W
    out_dim = params["c_w"].shape[0]
    head_dim = C // num_heads

    if b_tile is None:
        b_tile = _pick_b_tile(N, L)
    assert N % b_tile == 0 and (b_tile == N or b_tile % 8 == 0), (N, b_tile)

    # NCHW -> (N, L, C); token index = h*W + w (same as torch reshape+permute).
    x_tok = jnp.transpose(x_nchw.reshape(N, C, L), (0, 2, 1))

    f32 = jnp.float32
    pos = params["pos"].astype(f32)
    pos0, posr = pos[0:1], pos[1:]

    scale = float(head_dim) ** -0.5
    qw = (params["q_w"].T * scale).astype(compute_dtype)     # scale folded in
    qb = (params["q_b"] * scale).reshape(1, C).astype(f32)
    kw = params["k_w"].T.astype(compute_dtype)
    kb = params["k_b"].reshape(1, C).astype(f32)
    vw = params["v_w"].T.astype(compute_dtype)
    vb = params["v_b"].reshape(1, C).astype(f32)
    cw = params["c_w"].T.astype(compute_dtype)               # (C, out_dim)
    cb = params["c_b"].reshape(1, out_dim).astype(f32)

    # 0/1 head-membership matrix (C, H) and its transpose: lets the kernel do
    # every per-head reduction / broadcast as a lane-dense matmul.
    head_ids = jnp.arange(C) // head_dim
    hm = (head_ids[:, None] == jnp.arange(num_heads)[None, :]).astype(f32)
    hmt = hm.T

    kernel = functools.partial(_attention_pool_kernel, num_heads=num_heads,
                               compute_dtype=compute_dtype)

    const2d = lambda b: (0, 0)
    wbytes = jnp.dtype(compute_dtype).itemsize
    block_bytes = (
        2 * b_tile * L * C * x_tok.dtype.itemsize            # x block (2-buf)
        + 2 * b_tile * out_dim * 4                            # out block (2-buf)
        + (L + 1) * C * 4                                     # positional rows
        + (3 * C * C + C * out_dim) * wbytes                  # weights
        + (3 * C + out_dim) * 4                               # biases
        + 2 * C * num_heads * 4                               # head maps
    )
    # Generous headroom for f32 intermediates; clamped so it stays legal on
    # every TPU generation (v7x: 64 MiB physical VMEM).  At CLIP scale
    # (C=2048) on v7x the resident weights should additionally be
    # single-buffered (pl.Buffered(1)) or tiled over C with an f32 accumulator.
    vmem_limit = int(min(max(6 * block_bytes + (8 << 20), 32 << 20), 96 << 20))

    out = pl.pallas_call(
        kernel,
        out_shape=jax.ShapeDtypeStruct((N, out_dim), x_nchw.dtype),
        grid=(N // b_tile,),
        in_specs=[
            pl.BlockSpec((b_tile, L, C), lambda b: (b, 0, 0)),   # x tokens
            pl.BlockSpec((1, C), const2d),                       # pos row 0
            pl.BlockSpec((L, C), const2d),                       # pos rows 1..L
            pl.BlockSpec((C, num_heads), const2d),               # head map
            pl.BlockSpec((num_heads, C), const2d),               # head map^T
            pl.BlockSpec((C, C), const2d),                       # q weight
            pl.BlockSpec((1, C), const2d),                       # q bias
            pl.BlockSpec((C, C), const2d),                       # k weight
            pl.BlockSpec((1, C), const2d),                       # k bias
            pl.BlockSpec((C, C), const2d),                       # v weight
            pl.BlockSpec((1, C), const2d),                       # v bias
            pl.BlockSpec((C, out_dim), const2d),                 # c_proj weight
            pl.BlockSpec((1, out_dim), const2d),                 # c_proj bias
        ],
        out_specs=pl.BlockSpec((b_tile, out_dim), lambda b: (b, 0)),
        compiler_params=pltpu.CompilerParams(
            dimension_semantics=("parallel",),
            vmem_limit_bytes=vmem_limit),
    )(x_tok, pos0, posr, hm, hmt, qw, qb, kw, kb, vw, vb, cw, cb)
    return out


def reference_attention_pool_2d(x_nchw, params, num_heads):
    """Pure-JAX reference matching torch F.multi_head_attention_forward."""
    N, C, H, W = x_nchw.shape
    L = H * W
    x = jnp.transpose(x_nchw.reshape(N, C, L), (2, 0, 1))            # (L, N, C)
    x = jnp.concatenate([x.mean(axis=0, keepdims=True), x], axis=0)  # (L+1, N, C)
    x = x + params["pos"][:, None, :]
    head_dim = C // num_heads
    scale = head_dim ** -0.5
    q = x[0:1] @ params["q_w"].T + params["q_b"]
    k = x @ params["k_w"].T + params["k_b"]
    v = x @ params["v_w"].T + params["v_b"]
    q = q.reshape(1, N, num_heads, head_dim) * scale
    k = k.reshape(L + 1, N, num_heads, head_dim)
    v = v.reshape(L + 1, N, num_heads, head_dim)
    s = jnp.einsum("qnhd,knhd->nhqk", q, k)
    p = jax.nn.softmax(s, axis=-1)
    o = jnp.einsum("nhqk,knhd->qnhd", p, v).reshape(1, N, C)
    out = o @ params["c_w"].T + params["c_b"]
    return out[0]


if __name__ == "__main__":
    spacial_dim, embed_dim, num_heads, output_dim = 4, 32, 4, 16
    batch = 16                      # divisible by b_tile=8 -> grid of length 2
    L = spacial_dim ** 2

    key = jax.random.PRNGKey(0)
    ks = jax.random.split(key, 10)

    params = {
        "pos": jax.random.normal(ks[0], (L + 1, embed_dim), jnp.float32)
               / embed_dim ** 0.5,
        "q_w": jax.random.normal(ks[1], (embed_dim, embed_dim), jnp.float32) * 0.05,
        "q_b": jax.random.normal(ks[2], (embed_dim,), jnp.float32) * 0.02,
        "k_w": jax.random.normal(ks[3], (embed_dim, embed_dim), jnp.float32) * 0.05,
        "k_b": jax.random.normal(ks[4], (embed_dim,), jnp.float32) * 0.02,
        "v_w": jax.random.normal(ks[5], (embed_dim, embed_dim), jnp.float32) * 0.05,
        "v_b": jax.random.normal(ks[6], (embed_dim,), jnp.float32) * 0.02,
        "c_w": jax.random.normal(ks[7], (output_dim, embed_dim), jnp.float32) * 0.05,
        "c_b": jax.random.normal(ks[8], (output_dim,), jnp.float32) * 0.02,
    }

    x = jax.random.normal(
        ks[9], (batch, embed_dim, spacial_dim, spacial_dim), jnp.float32)

    ref = reference_attention_pool_2d(x, params, num_heads)

    # f32 compute path: tight parity with the pure-JAX / PyTorch reference.
    out_f32 = attention_pool_2d(x, params, num_heads, b_tile=8,
                                compute_dtype=jnp.float32)
    out_f32 = jax.block_until_ready(out_f32)
    assert out_f32.shape == (batch, output_dim), out_f32.shape
    assert jnp.allclose(out_f32, ref, atol=2e-4, rtol=2e-4), \
        float(jnp.max(jnp.abs(out_f32 - ref)))

    # bf16 MXU-operand path (f32 mean/softmax/accumulation): looser tolerance.
    out_bf16 = attention_pool_2d(x, params, num_heads, b_tile=8,
                                 compute_dtype=jnp.bfloat16)
    out_bf16 = jax.block_until_ready(out_bf16)
    assert out_bf16.shape == (batch, output_dim), out_bf16.shape
    assert jnp.allclose(out_bf16, ref, atol=2e-2, rtol=2e-2), \
        float(jnp.max(jnp.abs(out_bf16 - ref)))

    print("KERNEL_OK")
</pallas_src>

<mosaic_0001>
module attributes {stable_mosaic.version = 11 : i64} {
  func.func @_attention_pool_kernel(%arg0: i32, %arg1: memref<8x16x32xf32, #tpu.memory_space<vmem>>, %arg2: memref<1x32xf32, #tpu.memory_space<vmem>>, %arg3: memref<16x32xf32, #tpu.memory_space<vmem>>, %arg4: memref<32x4xf32, #tpu.memory_space<vmem>>, %arg5: memref<4x32xf32, #tpu.memory_space<vmem>>, %arg6: memref<32x32xf32, #tpu.memory_space<vmem>>, %arg7: memref<1x32xf32, #tpu.memory_space<vmem>>, %arg8: memref<32x32xf32, #tpu.memory_space<vmem>>, %arg9: memref<1x32xf32, #tpu.memory_space<vmem>>, %arg10: memref<32x32xf32, #tpu.memory_space<vmem>>, %arg11: memref<1x32xf32, #tpu.memory_space<vmem>>, %arg12: memref<32x16xf32, #tpu.memory_space<vmem>>, %arg13: memref<1x16xf32, #tpu.memory_space<vmem>>, %arg14: memref<8x16xf32, #tpu.memory_space<vmem>>) attributes {dimension_semantics = [#tpu.dimension_semantics<parallel>], iteration_bounds = array<i64: 2>, scalar_prefetch = 0 : i64, scratch_operands = 0 : i64, tpu.core_type = #tpu.core_type<tc>, window_params = [{transform_indices = @transform_0, window_bounds = array<i64: 8, 16, 32>}, {pipeline_mode = #tpu.pipeline_mode<synchronous>, transform_indices = @transform_1, window_bounds = array<i64: 1, 32>}, {pipeline_mode = #tpu.pipeline_mode<synchronous>, transform_indices = @transform_2, window_bounds = array<i64: 16, 32>}, {pipeline_mode = #tpu.pipeline_mode<synchronous>, transform_indices = @transform_3, window_bounds = array<i64: 32, 4>}, {pipeline_mode = #tpu.pipeline_mode<synchronous>, transform_indices = @transform_4, window_bounds = array<i64: 4, 32>}, {pipeline_mode = #tpu.pipeline_mode<synchronous>, transform_indices = @transform_5, window_bounds = array<i64: 32, 32>}, {pipeline_mode = #tpu.pipeline_mode<synchronous>, transform_indices = @transform_6, window_bounds = array<i64: 1, 32>}, {pipeline_mode = #tpu.pipeline_mode<synchronous>, transform_indices = @transform_7, window_bounds = array<i64: 32, 32>}, {pipeline_mode = #tpu.pipeline_mode<synchronous>, transform_indices = @transform_8, window_bounds = array<i64: 1, 32>}, {pipeline_mode = #tpu.pipeline_mode<synchronous>, transform_indices = @transform_9, window_bounds = array<i64: 32, 32>}, {pipeline_mode = #tpu.pipeline_mode<synchronous>, transform_indices = @transform_10, window_bounds = array<i64: 1, 32>}, {pipeline_mode = #tpu.pipeline_mode<synchronous>, transform_indices = @transform_11, window_bounds = array<i64: 32, 16>}, {pipeline_mode = #tpu.pipeline_mode<synchronous>, transform_indices = @transform_12, window_bounds = array<i64: 1, 16>}, {transform_indices = @transform_13, window_bounds = array<i64: 8, 16>}]} {
    %c0 = arith.constant 0 : index
    %c0_0 = arith.constant 0 : index
    %c0_1 = arith.constant 0 : index
    %0 = vector.load %arg1[%c0, %c0_0, %c0_1] : memref<8x16x32xf32, #tpu.memory_space<vmem>>, vector<8x16x32xf32>
    %cst = arith.constant dense<0.000000e+00> : vector<8x32xf32>
    %1 = vector.multi_reduction <add>, %0, %cst [1] : vector<8x16x32xf32> to vector<8x32xf32>
    %cst_2 = arith.constant 1.600000e+01 : f32
    %2 = vector.broadcast %cst_2 : f32 to vector<8x32xf32>
    %3 = arith.divf %1, %2 : vector<8x32xf32>
    %c0_3 = arith.constant 0 : index
    %c0_4 = arith.constant 0 : index
    %4 = vector.load %arg2[%c0_3, %c0_4] : memref<1x32xf32, #tpu.memory_space<vmem>>, vector<1x32xf32>
    %5 = vector.broadcast %4 : vector<1x32xf32> to vector<8x32xf32>
    %6 = arith.addf %3, %5 : vector<8x32xf32>
    %c0_5 = arith.constant 0 : index
    %c0_6 = arith.constant 0 : index
    %7 = vector.load %arg3[%c0_5, %c0_6] : memref<16x32xf32, #tpu.memory_space<vmem>>, vector<16x32xf32>
    %8 = vector.shape_cast %7 : vector<16x32xf32> to vector<1x16x32xf32>
    %9 = vector.broadcast %8 : vector<1x16x32xf32> to vector<8x16x32xf32>
    %10 = arith.addf %0, %9 : vector<8x16x32xf32>
    %11 = vector.shape_cast %10 : vector<8x16x32xf32> to vector<128x32xf32>
    %c0_7 = arith.constant 0 : index
    %c0_8 = arith.constant 0 : index
    %12 = vector.load %arg6[%c0_7, %c0_8] : memref<32x32xf32, #tpu.memory_space<vmem>>, vector<32x32xf32>
    %cst_9 = arith.constant dense<0.000000e+00> : vector<8x32xf32>
    %13 = tpu.matmul %6, %12, %cst_9 {dimension_numbers = #tpu.dot_dimension_numbers<[1], [0], [0], [1], [0, 0, 1, 1], [], []>} : vector<8x32xf32>, vector<32x32xf32>, vector<8x32xf32> -> vector<8x32xf32>
    %c0_10 = arith.constant 0 : index
    %c0_11 = arith.constant 0 : index
    %14 = vector.load %arg7[%c0_10, %c0_11] : memref<1x32xf32, #tpu.memory_space<vmem>>, vector<1x32xf32>
    %15 = vector.broadcast %14 : vector<1x32xf32> to vector<8x32xf32>
    %16 = arith.addf %13, %15 : vector<8x32xf32>
    %c0_12 = arith.constant 0 : index
    %c0_13 = arith.constant 0 : index
    %17 = vector.load %arg8[%c0_12, %c0_13] : memref<32x32xf32, #tpu.memory_space<vmem>>, vector<32x32xf32>
    %cst_14 = arith.constant dense<0.000000e+00> : vector<8x32xf32>
    %18 = tpu.matmul %6, %17, %cst_14 {dimension_numbers = #tpu.dot_dimension_numbers<[1], [0], [0], [1], [0, 0, 1, 1], [], []>} : vector<8x32xf32>, vector<32x32xf32>, vector<8x32xf32> -> vector<8x32xf32>
    %c0_15 = arith.constant 0 : index
    %c0_16 = arith.constant 0 : index
    %19 = vector.load %arg9[%c0_15, %c0_16] : memref<1x32xf32, #tpu.memory_space<vmem>>, vector<1x32xf32>
    %20 = vector.broadcast %19 : vector<1x32xf32> to vector<8x32xf32>
    %21 = arith.addf %18, %20 : vector<8x32xf32>
    %c0_17 = arith.constant 0 : index
    %c0_18 = arith.constant 0 : index
    %22 = vector.load %arg10[%c0_17, %c0_18] : memref<32x32xf32, #tpu.memory_space<vmem>>, vector<32x32xf32>
    %cst_19 = arith.constant dense<0.000000e+00> : vector<8x32xf32>
    %23 = tpu.matmul %6, %22, %cst_19 {dimension_numbers = #tpu.dot_dimension_numbers<[1], [0], [0], [1], [0, 0, 1, 1], [], []>} : vector<8x32xf32>, vector<32x32xf32>, vector<8x32xf32> -> vector<8x32xf32>
    %c0_20 = arith.constant 0 : index
    %c0_21 = arith.constant 0 : index
    %24 = vector.load %arg11[%c0_20, %c0_21] : memref<1x32xf32, #tpu.memory_space<vmem>>, vector<1x32xf32>
    %25 = vector.broadcast %24 : vector<1x32xf32> to vector<8x32xf32>
    %26 = arith.addf %23, %25 : vector<8x32xf32>
    %c0_22 = arith.constant 0 : index
    %c0_23 = arith.constant 0 : index
    %27 = vector.load %arg8[%c0_22, %c0_23] : memref<32x32xf32, #tpu.memory_space<vmem>>, vector<32x32xf32>
    %cst_24 = arith.constant dense<0.000000e+00> : vector<128x32xf32>
    %28 = tpu.matmul %11, %27, %cst_24 {dimension_numbers = #tpu.dot_dimension_numbers<[1], [0], [0], [1], [0, 0, 1, 1], [], []>} : vector<128x32xf32>, vector<32x32xf32>, vector<128x32xf32> -> vector<128x32xf32>
    %c0_25 = arith.constant 0 : index
    %c0_26 = arith.constant 0 : index
    %29 = vector.load %arg9[%c0_25, %c0_26] : memref<1x32xf32, #tpu.memory_space<vmem>>, vector<1x32xf32>
    %30 = vector.broadcast %29 : vector<1x32xf32> to vector<128x32xf32>
    %31 = arith.addf %28, %30 : vector<128x32xf32>
    %32 = vector.shape_cast %31 : vector<128x32xf32> to vector<8x16x32xf32>
    %c0_27 = arith.constant 0 : index
    %c0_28 = arith.constant 0 : index
    %33 = vector.load %arg10[%c0_27, %c0_28] : memref<32x32xf32, #tpu.memory_space<vmem>>, vector<32x32xf32>
    %cst_29 = arith.constant dense<0.000000e+00> : vector<128x32xf32>
    %34 = tpu.matmul %11, %33, %cst_29 {dimension_numbers = #tpu.dot_dimension_numbers<[1], [0], [0], [1], [0, 0, 1, 1], [], []>} : vector<128x32xf32>, vector<32x32xf32>, vector<128x32xf32> -> vector<128x32xf32>
    %c0_30 = arith.constant 0 : index
    %c0_31 = arith.constant 0 : index
    %35 = vector.load %arg11[%c0_30, %c0_31] : memref<1x32xf32, #tpu.memory_space<vmem>>, vector<1x32xf32>
    %36 = vector.broadcast %35 : vector<1x32xf32> to vector<128x32xf32>
    %37 = arith.addf %34, %36 : vector<128x32xf32>
    %38 = vector.shape_cast %37 : vector<128x32xf32> to vector<8x16x32xf32>
    %39 = vector.shape_cast %16 : vector<8x32xf32> to vector<8x1x32xf32>
    %40 = vector.broadcast %39 : vector<8x1x32xf32> to vector<8x16x32xf32>
    %41 = arith.mulf %40, %32 : vector<8x16x32xf32>
    %42 = vector.shape_cast %41 : vector<8x16x32xf32> to vector<128x32xf32>
    %c0_32 = arith.constant 0 : index
    %c0_33 = arith.constant 0 : index
    %43 = vector.load %arg4[%c0_32, %c0_33] : memref<32x4xf32, #tpu.memory_space<vmem>>, vector<32x4xf32>
    %cst_34 = arith.constant dense<0.000000e+00> : vector<128x4xf32>
    %44 = tpu.matmul %42, %43, %cst_34 {dimension_numbers = #tpu.dot_dimension_numbers<[1], [0], [0], [1], [0, 0, 1, 1], [], []>} : vector<128x32xf32>, vector<32x4xf32>, vector<128x4xf32> -> vector<128x4xf32>
    %45 = vector.shape_cast %44 : vector<128x4xf32> to vector<8x16x4xf32>
    %46 = arith.mulf %16, %21 : vector<8x32xf32>
    %c0_35 = arith.constant 0 : index
    %c0_36 = arith.constant 0 : index
    %47 = vector.load %arg4[%c0_35, %c0_36] : memref<32x4xf32, #tpu.memory_space<vmem>>, vector<32x4xf32>
    %cst_37 = arith.constant dense<0.000000e+00> : vector<8x4xf32>
    %48 = tpu.matmul %46, %47, %cst_37 {dimension_numbers = #tpu.dot_dimension_numbers<[1], [0], [0], [1], [0, 0, 1, 1], [], []>} : vector<8x32xf32>, vector<32x4xf32>, vector<8x4xf32> -> vector<8x4xf32>
    %cst_38 = arith.constant dense<0xFF800000> : vector<8x4xf32>
    %49 = vector.multi_reduction <maximumf>, %45, %cst_38 [1] : vector<8x16x4xf32> to vector<8x4xf32>
    %50 = arith.maximumf %49, %48 : vector<8x4xf32>
    %51 = vector.shape_cast %50 : vector<8x4xf32> to vector<8x1x4xf32>
    %52 = vector.broadcast %51 : vector<8x1x4xf32> to vector<8x16x4xf32>
    %53 = arith.subf %45, %52 : vector<8x16x4xf32>
    %54 = math.exp %53 : vector<8x16x4xf32>
    %55 = arith.subf %48, %50 : vector<8x4xf32>
    %56 = math.exp %55 : vector<8x4xf32>
    %cst_39 = arith.constant dense<0.000000e+00> : vector<8x4xf32>
    %57 = vector.multi_reduction <add>, %54, %cst_39 [1] : vector<8x16x4xf32> to vector<8x4xf32>
    %58 = arith.addf %57, %56 : vector<8x4xf32>
    %59 = tpu.reciprocal %58 : vector<8x4xf32> -> vector<8x4xf32>
    %60 = vector.shape_cast %59 : vector<8x4xf32> to vector<8x1x4xf32>
    %61 = vector.broadcast %60 : vector<8x1x4xf32> to vector<8x16x4xf32>
    %62 = arith.mulf %54, %61 : vector<8x16x4xf32>
    %63 = arith.mulf %56, %59 : vector<8x4xf32>
    %64 = vector.shape_cast %62 : vector<8x16x4xf32> to vector<128x4xf32>
    %c0_40 = arith.constant 0 : index
    %c0_41 = arith.constant 0 : index
    %65 = vector.load %arg5[%c0_40, %c0_41] : memref<4x32xf32, #tpu.memory_space<vmem>>, vector<4x32xf32>
    %cst_42 = arith.constant dense<0.000000e+00> : vector<128x32xf32>
    %66 = tpu.matmul %64, %65, %cst_42 {dimension_numbers = #tpu.dot_dimension_numbers<[1], [0], [0], [1], [0, 0, 1, 1], [], []>} : vector<128x4xf32>, vector<4x32xf32>, vector<128x32xf32> -> vector<128x32xf32>
    %67 = vector.shape_cast %66 : vector<128x32xf32> to vector<8x16x32xf32>
    %c0_43 = arith.constant 0 : index
    %c0_44 = arith.constant 0 : index
    %68 = vector.load %arg5[%c0_43, %c0_44] : memref<4x32xf32, #tpu.memory_space<vmem>>, vector<4x32xf32>
    %cst_45 = arith.constant dense<0.000000e+00> : vector<8x32xf32>
    %69 = tpu.matmul %63, %68, %cst_45 {dimension_numbers = #tpu.dot_dimension_numbers<[1], [0], [0], [1], [0, 0, 1, 1], [], []>} : vector<8x4xf32>, vector<4x32xf32>, vector<8x32xf32> -> vector<8x32xf32>
    %70 = arith.mulf %67, %38 : vector<8x16x32xf32>
    %cst_46 = arith.constant dense<0.000000e+00> : vector<8x32xf32>
    %71 = vector.multi_reduction <add>, %70, %cst_46 [1] : vector<8x16x32xf32> to vector<8x32xf32>
    %72 = arith.mulf %69, %26 : vector<8x32xf32>
    %73 = arith.addf %71, %72 : vector<8x32xf32>
    %c0_47 = arith.constant 0 : index
    %c0_48 = arith.constant 0 : index
    %74 = vector.load %arg12[%c0_47, %c0_48] : memref<32x16xf32, #tpu.memory_space<vmem>>, vector<32x16xf32>
    %cst_49 = arith.constant dense<0.000000e+00> : vector<8x16xf32>
    %75 = tpu.matmul %73, %74, %cst_49 {dimension_numbers = #tpu.dot_dimension_numbers<[1], [0], [0], [1], [0, 0, 1, 1], [], []>} : vector<8x32xf32>, vector<32x16xf32>, vector<8x16xf32> -> vector<8x16xf32>
    %c0_50 = arith.constant 0 : index
    %c0_51 = arith.constant 0 : index
    %76 = vector.load %arg13[%c0_50, %c0_51] : memref<1x16xf32, #tpu.memory_space<vmem>>, vector<1x16xf32>
    %77 = vector.broadcast %76 : vector<1x16xf32> to vector<8x16xf32>
    %78 = arith.addf %75, %77 : vector<8x16xf32>
    %c0_52 = arith.constant 0 : index
    %c0_53 = arith.constant 0 : index
    %79 = vector.load %arg14[%c0_52, %c0_53] : memref<8x16xf32, #tpu.memory_space<vmem>>, vector<8x16xf32>
    tpu.vector_store %arg14[%c0_52, %c0_53], %78 {strides = array<i32>} : memref<8x16xf32, #tpu.memory_space<vmem>>, vector<8x16xf32>,
    return
  }
  func.func @transform_0(%arg0: i32) -> (i32, i32, i32) {
    %c0_i32 = arith.constant 0 : i32
    %c0_i32_0 = arith.constant 0 : i32
    %c0_i32_1 = arith.constant 0 : i32
    return %arg0, %c0_i32, %c0_i32_0 : i32, i32, i32
  }
  func.func @transform_1(%arg0: i32) -> (i32, i32) {
    %c0_i32 = arith.constant 0 : i32
    %c0_i32_0 = arith.constant 0 : i32
    %c0_i32_1 = arith.constant 0 : i32
    return %c0_i32, %c0_i32_0 : i32, i32
  }
  func.func @transform_2(%arg0: i32) -> (i32, i32) {
    %c0_i32 = arith.constant 0 : i32
    %c0_i32_0 = arith.constant 0 : i32
    %c0_i32_1 = arith.constant 0 : i32
    return %c0_i32, %c0_i32_0 : i32, i32
  }
  func.func @transform_3(%arg0: i32) -> (i32, i32) {
    %c0_i32 = arith.constant 0 : i32
    %c0_i32_0 = arith.constant 0 : i32
    %c0_i32_1 = arith.constant 0 : i32
    return %c0_i32, %c0_i32_0 : i32, i32
  }
  func.func @transform_4(%arg0: i32) -> (i32, i32) {
    %c0_i32 = arith.constant 0 : i32
    %c0_i32_0 = arith.constant 0 : i32
    %c0_i32_1 = arith.constant 0 : i32
    return %c0_i32, %c0_i32_0 : i32, i32
  }
  func.func @transform_5(%arg0: i32) -> (i32, i32) {
    %c0_i32 = arith.constant 0 : i32
    %c0_i32_0 = arith.constant 0 : i32
    %c0_i32_1 = arith.constant 0 : i32
    return %c0_i32, %c0_i32_0 : i32, i32
  }
  func.func @transform_6(%arg0: i32) -> (i32, i32) {
    %c0_i32 = arith.constant 0 : i32
    %c0_i32_0 = arith.constant 0 : i32
    %c0_i32_1 = arith.constant 0 : i32
    return %c0_i32, %c0_i32_0 : i32, i32
  }
  func.func @transform_7(%arg0: i32) -> (i32, i32) {
    %c0_i32 = arith.constant 0 : i32
    %c0_i32_0 = arith.constant 0 : i32
    %c0_i32_1 = arith.constant 0 : i32
    return %c0_i32, %c0_i32_0 : i32, i32
  }
  func.func @transform_8(%arg0: i32) -> (i32, i32) {
    %c0_i32 = arith.constant 0 : i32
    %c0_i32_0 = arith.constant 0 : i32
    %c0_i32_1 = arith.constant 0 : i32
    return %c0_i32, %c0_i32_0 : i32, i32
  }
  func.func @transform_9(%arg0: i32) -> (i32, i32) {
    %c0_i32 = arith.constant 0 : i32
    %c0_i32_0 = arith.constant 0 : i32
    %c0_i32_1 = arith.constant 0 : i32
    return %c0_i32, %c0_i32_0 : i32, i32
  }
  func.func @transform_10(%arg0: i32) -> (i32, i32) {
    %c0_i32 = arith.constant 0 : i32
    %c0_i32_0 = arith.constant 0 : i32
    %c0_i32_1 = arith.constant 0 : i32
    return %c0_i32, %c0_i32_0 : i32, i32
  }
  func.func @transform_11(%arg0: i32) -> (i32, i32) {
    %c0_i32 = arith.constant 0 : i32
    %c0_i32_0 = arith.constant 0 : i32
    %c0_i32_1 = arith.constant 0 : i32
    return %c0_i32, %c0_i32_0 : i32, i32
  }
  func.func @transform_12(%arg0: i32) -> (i32, i32) {
    %c0_i32 = arith.constant 0 : i32
    %c0_i32_0 = arith.constant 0 : i32
    %c0_i32_1 = arith.constant 0 : i32
    return %c0_i32, %c0_i32_0 : i32, i32
  }
  func.func @transform_13(%arg0: i32) -> (i32, i32) {
    %c0_i32 = arith.constant 0 : i32
    %c0_i32_0 = arith.constant 0 : i32
    return %arg0, %c0_i32 : i32, i32
  }
}

</mosaic_0001>

<llo_original>
// kernel: tpu_custom_call.1
$region0: #{tpu_custom_call.1}
  #allocation0 [shape = 'u32[]', space=smem, size = 0x4, offset = 0x4, fixed_abs, tag = 'smem constant byte address 0x4 - core index']
  #allocation1 [shape = 'u32[72,128]{1,0:T(1,128)}', space=vmem, size = 0x9000, scoped, tag = 'internal scratch']
  %s0 = inlined_call_operand.hbm [shape: f32[16,16,32], index: 0, kind: input, shape index: {}]
  %s1 = inlined_call_operand.hbm [shape: f32[1,32], index: 1, kind: input, shape index: {}]
  %s2 = inlined_call_operand.hbm [shape: f32[16,32], index: 2, kind: input, shape index: {}]
  %s3 = inlined_call_operand.vmem [shape: f32[32,4], index: 3, kind: input, shape index: {}]
  %s4 = inlined_call_operand.vmem [shape: f32[4,32], index: 4, kind: input, shape index: {}]
  %s5 = inlined_call_operand.vmem [shape: f32[32,32], index: 5, kind: input, shape index: {}]
  %s6 = inlined_call_operand.vmem [shape: f32[1,32], index: 6, kind: input, shape index: {}]
  %s7 = inlined_call_operand.vmem [shape: f32[32,32], index: 7, kind: input, shape index: {}]
  %s8 = inlined_call_operand.vmem [shape: f32[1,32], index: 8, kind: input, shape index: {}]
  %s9 = inlined_call_operand.hbm [shape: f32[32,32], index: 9, kind: input, shape index: {}]
  %s10 = inlined_call_operand.vmem [shape: f32[1,32], index: 10, kind: input, shape index: {}]
  %s11 = inlined_call_operand.vmem [shape: f32[32,16], index: 11, kind: input, shape index: {}]
  %s12 = inlined_call_operand.vmem [shape: f32[1,16], index: 12, kind: input, shape index: {}]
  %s13 = inlined_call_operand.hbm [shape: f32[16,16], index: 13, kind: output, shape index: {}]
  %s14 = sld [smem:[#allocation0]]
  $region101: #{tpu_custom_call.1} parent=0
    _
  %s16 = ssub.s32 1, %s14
  %s17 = scalar_select 0, %s16, %s14
  $region1: #{tpu_custom_call.1} parent=0
    #allocation2 [shape = 'u8[131072]{0}', space=vmem, size = 0x20000, scoped, tag = 'input window, operand 0']
    #allocation3 [shape = 's32[2]{0}', space=sflag, size = 0x8, scoped, tag = 'scoped memory for tpu_custom_call.1']
    #allocation4 [shape = 's32[2]{0}', space=sflag, size = 0x8, scoped, tag = 'scoped memory for tpu_custom_call.1']
    #allocation5 [shape = 'u8[512]{0}', space=vmem, size = 0x400, scoped, tag = 'input window, operand 1, single buffered']
    #allocation6 [shape = 's32[1]{0}', space=sflag, size = 0x4, scoped, tag = 'scoped memory for tpu_custom_call.1']
    #allocation7 [shape = 'u8[8192]{0}', space=vmem, size = 0x2000, scoped, tag = 'input window, operand 2, single buffered']
    #allocation8 [shape = 'u8[16384]{0}', space=vmem, size = 0x4000, scoped, tag = 'input window, operand 9, single buffered']
    #allocation9 [shape = 's32[1]{0}', space=sflag, size = 0x4, scoped, tag = 'scoped memory for tpu_custom_call.1']
    #allocation10 [shape = 'u8[8192]{0}', space=vmem, size = 0x2000, scoped, tag = 'output window, operand 0']
    %18 = vsyncpa [#allocation3], 0
    %s19 = scalar_lea.sflag [#allocation3], 1
    %20 = vsyncpa %s19, 0
    %21 = vsyncpa [#allocation6], 0
    %22 = vsyncpa [#allocation9], 0
    %23 = vsyncpa [#allocation4], 0
    %s24 = scalar_lea.sflag [#allocation4], 1
    %25 = vsyncpa %s24, 0
    loop: start=0, step=1, limit=4
    $region2: #{tpu_custom_call.1} parent=1 // loop_pre_header
      _
    $region3: #{tpu_custom_call.1} parent=1 // loop_header
      %s27 = sphi 0, %s31
      %p28 = scmp.ge.s32.totalorder %s27, 4
      %s37 = sphi 0, %s39
      %s40 = sphi 0, %s37
      %s41 = sphi 0, %s40
      %s57 = sphi 0, %s41
      %s61 = sphi 0, %s61
      %s63 = sphi 0, %s61
      %s64 = sphi 0, %s63
      %s78 = sphi 0, %s64
      %s82 = sphi 0, %s82
      %s84 = sphi 0, %s82
      %s85 = sphi 0, %s84
      %s99 = sphi 0, %s85
      %s103 = sphi 0, %s103
      %s105 = sphi 0, %s103
      %s106 = sphi 0, %s105
      %s120 = sphi 0, %s106
      %s124 = sphi 0, %s124
      %s126 = sphi 0, %s124
      %s127 = sphi 0, %s126
      %s141 = sphi 0, %s127
      %s145 = sphi 0, %s145
      %s147 = sphi 0, %s145
      %s148 = sphi 0, %s147
      %s162 = sphi 0, %s148
      %s166 = sphi 0, %s166
      %s168 = sphi 0, %s166
      %s169 = sphi 0, %s168
      %s183 = sphi 0, %s169
      %s187 = sphi 0, %s187
      %s189 = sphi 0, %s187
      %s190 = sphi 0, %s189
      %s204 = sphi 0, %s190
      %s208 = sphi 0, %s208
      %s210 = sphi 0, %s208
      %s211 = sphi 0, %s210
      %s225 = sphi 0, %s211
      %s229 = sphi 0, %s229
      %s231 = sphi 0, %s229
      %s232 = sphi 0, %s231
      %s246 = sphi 0, %s232
      %s250 = sphi 0, %s250
      %s252 = sphi 0, %s250
      %s253 = sphi 0, %s252
      %s267 = sphi 0, %s253
      %s271 = sphi 0, %s271
      %s273 = sphi 0, %s271
      %s274 = sphi 0, %s273
      %s288 = sphi 0, %s274
      %s292 = sphi 0, %s292
      %s294 = sphi 0, %s292
      %s295 = sphi 0, %s294
      %s309 = sphi 0, %s295
      %s315 = sphi 0, %s317
      %s318 = sphi 0, %s315
      %s319 = sphi 0, %s318
      %s335 = sphi 0, %s319
    $region4: #{tpu_custom_call.1} parent=1 // loop_header_branch
      %30 = sbr.rel (%p28) target = $region8
    $region5: #{tpu_custom_call.1} parent=1 // loop_body
      %s32 = ssub.s32 %s27, 1
      %s33 = ssub.s32 %s27, 2
      %s34 = sadd.s32 %s27, 1
      %s35 = ssub.s32 %s27, %s34
      %p36 = scmp.eq.s32.totalorder %s35, 0
      %s38 = sadd.s32 %s37, 1
      %s39 = scalar_select %p36, %s37, %s38
      %p42 = pneg %p36
      %p43 = scmp.eq.s32.totalorder %s27, 1
      %p44 = por %p42, %p43
      %p45 = scmp.ne.s32.totalorder %s37, %s40
      %p46 = scmp.eq.s32.totalorder %s27, 0
      %p47 = por %p45, %p46
      %p48 = scmp.ne.s32.totalorder %s37, %s40
      %p49 = scmp.eq.s32.totalorder %s32, 1
      %p50 = por %p48, %p49
      %p51 = scmp.ne.s32.totalorder %s40, %s41
      %p52 = scmp.eq.s32.totalorder %s32, 0
      %p53 = por %p51, %p52
      %p54 = scmp.ne.s32.totalorder %s40, %s41
      %p55 = scmp.eq.s32.totalorder %s33, 1
      %p56 = por %p54, %p55
      %p58 = scmp.ne.s32.totalorder %s41, %s57
      %p59 = scmp.eq.s32.totalorder %s33, 0
      %p60 = por %p58, %p59
      %s62 = sadd.s32 %s61, 1
      %p65 = scmp.eq.s32.totalorder %s27, 1
      %p66 = scmp.ne.s32.totalorder %s61, %s63
      %p67 = scmp.eq.s32.totalorder %s27, 0
      %p68 = por %p66, %p67
      %p69 = scmp.ne.s32.totalorder %s61, %s63
      %p70 = scmp.eq.s32.totalorder %s32, 1
      %p71 = por %p69, %p70
      %p72 = scmp.ne.s32.totalorder %s63, %s64
      %p73 = scmp.eq.s32.totalorder %s32, 0
      %p74 = por %p72, %p73
      %p75 = scmp.ne.s32.totalorder %s63, %s64
      %p76 = scmp.eq.s32.totalorder %s33, 1
      %p77 = por %p75, %p76
      %p79 = scmp.ne.s32.totalorder %s64, %s78
      %p80 = scmp.eq.s32.totalorder %s33, 0
      %p81 = por %p79, %p80
      %s83 = sadd.s32 %s82, 1
      %p86 = scmp.eq.s32.totalorder %s27, 1
      %p87 = scmp.ne.s32.totalorder %s82, %s84
      %p88 = scmp.eq.s32.totalorder %s27, 0
      %p89 = por %p87, %p88
      %p90 = scmp.ne.s32.totalorder %s82, %s84
      %p91 = scmp.eq.s32.totalorder %s32, 1
      %p92 = por %p90, %p91
      %p93 = scmp.ne.s32.totalorder %s84, %s85
      %p94 = scmp.eq.s32.totalorder %s32, 0
      %p95 = por %p93, %p94
      %p96 = scmp.ne.s32.totalorder %s84, %s85
      %p97 = scmp.eq.s32.totalorder %s33, 1
      %p98 = por %p96, %p97
      %p100 = scmp.ne.s32.totalorder %s85, %s99
      %p101 = scmp.eq.s32.totalorder %s33, 0
      %p102 = por %p100, %p101
      %s104 = sadd.s32 %s103, 1
      %p107 = scmp.eq.s32.totalorder %s27, 1
      %p108 = scmp.ne.s32.totalorder %s103, %s105
      %p109 = scmp.eq.s32.totalorder %s27, 0
      %p110 = por %p108, %p109
      %p111 = scmp.ne.s32.totalorder %s103, %s105
      %p112 = scmp.eq.s32.totalorder %s32, 1
      %p113 = por %p111, %p112
      %p114 = scmp.ne.s32.totalorder %s105, %s106
      %p115 = scmp.eq.s32.totalorder %s32, 0
      %p116 = por %p114, %p115
      %p117 = scmp.ne.s32.totalorder %s105, %s106
      %p118 = scmp.eq.s32.totalorder %s33, 1
      %p119 = por %p117, %p118
      %p121 = scmp.ne.s32.totalorder %s106, %s120
      %p122 = scmp.eq.s32.totalorder %s33, 0
      %p123 = por %p121, %p122
      %s125 = sadd.s32 %s124, 1
      %p128 = scmp.eq.s32.totalorder %s27, 1
      %p129 = scmp.ne.s32.totalorder %s124, %s126
      %p130 = scmp.eq.s32.totalorder %s27, 0
      %p131 = por %p129, %p130
      %p132 = scmp.ne.s32.totalorder %s124, %s126
      %p133 = scmp.eq.s32.totalorder %s32, 1
      %p134 = por %p132, %p133
      %p135 = scmp.ne.s32.totalorder %s126, %s127
      %p136 = scmp.eq.s32.totalorder %s32, 0
      %p137 = por %p135, %p136
      %p138 = scmp.ne.s32.totalorder %s126, %s127
      %p139 = scmp.eq.s32.totalorder %s33, 1
      %p140 = por %p138, %p139
      %p142 = scmp.ne.s32.totalorder %s127, %s141
      %p143 = scmp.eq.s32.totalorder %s33, 0
      %p144 = por %p142, %p143
      %s146 = sadd.s32 %s145, 1
      %p149 = scmp.eq.s32.totalorder %s27, 1
      %p150 = scmp.ne.s32.totalorder %s145, %s147
      %p151 = scmp.eq.s32.totalorder %s27, 0
      %p152 = por %p150, %p151
      %p153 = scmp.ne.s32.totalorder %s145, %s147
      %p154 = scmp.eq.s32.totalorder %s32, 1
      %p155 = por %p153, %p154
      %p156 = scmp.ne.s32.totalorder %s147, %s148
      %p157 = scmp.eq.s32.totalorder %s32, 0
      %p158 = por %p156, %p157
      %p159 = scmp.ne.s32.totalorder %s147, %s148
      %p160 = scmp.eq.s32.totalorder %s33, 1
      %p161 = por %p159, %p160
      %p163 = scmp.ne.s32.totalorder %s148, %s162
      %p164 = scmp.eq.s32.totalorder %s33, 0
      %p165 = por %p163, %p164
      %s167 = sadd.s32 %s166, 1
      %p170 = scmp.eq.s32.totalorder %s27, 1
      %p171 = scmp.ne.s32.totalorder %s166, %s168
      %p172 = scmp.eq.s32.totalorder %s27, 0
      %p173 = por %p171, %p172
      %p174 = scmp.ne.s32.totalorder %s166, %s168
      %p175 = scmp.eq.s32.totalorder %s32, 1
      %p176 = por %p174, %p175
      %p177 = scmp.ne.s32.totalorder %s168, %s169
      %p178 = scmp.eq.s32.totalorder %s32, 0
      %p179 = por %p177, %p178
      %p180 = scmp.ne.s32.totalorder %s168, %s169
      %p181 = scmp.eq.s32.totalorder %s33, 1
      %p182 = por %p180, %p181
      %p184 = scmp.ne.s32.totalorder %s169, %s183
      %p185 = scmp.eq.s32.totalorder %s33, 0
      %p186 = por %p184, %p185
      %s188 = sadd.s32 %s187, 1
      %p191 = scmp.eq.s32.totalorder %s27, 1
      %p192 = scmp.ne.s32.totalorder %s187, %s189
      %p193 = scmp.eq.s32.totalorder %s27, 0
      %p194 = por %p192, %p193
      %p195 = scmp.ne.s32.totalorder %s187, %s189
      %p196 = scmp.eq.s32.totalorder %s32, 1
      %p197 = por %p195, %p196
      %p198 = scmp.ne.s32.totalorder %s189, %s190
      %p199 = scmp.eq.s32.totalorder %s32, 0
      %p200 = por %p198, %p199
      %p201 = scmp.ne.s32.totalorder %s189, %s190
      %p202 = scmp.eq.s32.totalorder %s33, 1
      %p203 = por %p201, %p202
      %p205 = scmp.ne.s32.totalorder %s190, %s204
      %p206 = scmp.eq.s32.totalorder %s33, 0
      %p207 = por %p205, %p206
      %s209 = sadd.s32 %s208, 1
      %p212 = scmp.eq.s32.totalorder %s27, 1
      %p213 = scmp.ne.s32.totalorder %s208, %s210
      %p214 = scmp.eq.s32.totalorder %s27, 0
      %p215 = por %p213, %p214
      %p216 = scmp.ne.s32.totalorder %s208, %s210
      %p217 = scmp.eq.s32.totalorder %s32, 1
      %p218 = por %p216, %p217
      %p219 = scmp.ne.s32.totalorder %s210, %s211
      %p220 = scmp.eq.s32.totalorder %s32, 0
      %p221 = por %p219, %p220
      %p222 = scmp.ne.s32.totalorder %s210, %s211
      %p223 = scmp.eq.s32.totalorder %s33, 1
      %p224 = por %p222, %p223
      %p226 = scmp.ne.s32.totalorder %s211, %s225
      %p227 = scmp.eq.s32.totalorder %s33, 0
      %p228 = por %p226, %p227
      %s230 = sadd.s32 %s229, 1
      %p233 = scmp.eq.s32.totalorder %s27, 1
      %p234 = scmp.ne.s32.totalorder %s229, %s231
      %p235 = scmp.eq.s32.totalorder %s27, 0
      %p236 = por %p234, %p235
      %p237 = scmp.ne.s32.totalorder %s229, %s231
      %p238 = scmp.eq.s32.totalorder %s32, 1
      %p239 = por %p237, %p238
      %p240 = scmp.ne.s32.totalorder %s231, %s232
      %p241 = scmp.eq.s32.totalorder %s32, 0
      %p242 = por %p240, %p241
      %p243 = scmp.ne.s32.totalorder %s231, %s232
      %p244 = scmp.eq.s32.totalorder %s33, 1
      %p245 = por %p243, %p244
      %p247 = scmp.ne.s32.totalorder %s232, %s246
      %p248 = scmp.eq.s32.totalorder %s33, 0
      %p249 = por %p247, %p248
      %s251 = sadd.s32 %s250, 1
      %p254 = scmp.eq.s32.totalorder %s27, 1
      %p255 = scmp.ne.s32.totalorder %s250, %s252
      %p256 = scmp.eq.s32.totalorder %s27, 0
      %p257 = por %p255, %p256
      %p258 = scmp.ne.s32.totalorder %s250, %s252
      %p259 = scmp.eq.s32.totalorder %s32, 1
      %p260 = por %p258, %p259
      %p261 = scmp.ne.s32.totalorder %s252, %s253
      %p262 = scmp.eq.s32.totalorder %s32, 0
      %p263 = por %p261, %p262
      %p264 = scmp.ne.s32.totalorder %s252, %s253
      %p265 = scmp.eq.s32.totalorder %s33, 1
      %p266 = por %p264, %p265
      %p268 = scmp.ne.s32.totalorder %s253, %s267
      %p269 = scmp.eq.s32.totalorder %s33, 0
      %p270 = por %p268, %p269
      %s272 = sadd.s32 %s271, 1
      %p275 = scmp.eq.s32.totalorder %s27, 1
      %p276 = scmp.ne.s32.totalorder %s271, %s273
      %p277 = scmp.eq.s32.totalorder %s27, 0
      %p278 = por %p276, %p277
      %p279 = scmp.ne.s32.totalorder %s271, %s273
      %p280 = scmp.eq.s32.totalorder %s32, 1
      %p281 = por %p279, %p280
      %p282 = scmp.ne.s32.totalorder %s273, %s274
      %p283 = scmp.eq.s32.totalorder %s32, 0
      %p284 = por %p282, %p283
      %p285 = scmp.ne.s32.totalorder %s273, %s274
      %p286 = scmp.eq.s32.totalorder %s33, 1
      %p287 = por %p285, %p286
      %p289 = scmp.ne.s32.totalorder %s274, %s288
      %p290 = scmp.eq.s32.totalorder %s33, 0
      %p291 = por %p289, %p290
      %s293 = sadd.s32 %s292, 1
      %p296 = scmp.eq.s32.totalorder %s27, 1
      %p297 = scmp.ne.s32.totalorder %s292, %s294
      %p298 = scmp.eq.s32.totalorder %s27, 0
      %p299 = por %p297, %p298
      %p300 = scmp.ne.s32.totalorder %s292, %s294
      %p301 = scmp.eq.s32.totalorder %s32, 1
      %p302 = por %p300, %p301
      %p303 = scmp.ne.s32.totalorder %s294, %s295
      %p304 = scmp.eq.s32.totalorder %s32, 0
      %p305 = por %p303, %p304
      %p306 = scmp.ne.s32.totalorder %s294, %s295
      %p307 = scmp.eq.s32.totalorder %s33, 1
      %p308 = por %p306, %p307
      %p310 = scmp.ne.s32.totalorder %s295, %s309
      %p311 = scmp.eq.s32.totalorder %s33, 0
      %p312 = por %p310, %p311
      %s313 = ssub.s32 %s27, %s34
      %p314 = scmp.eq.s32.totalorder %s313, 0
      %s316 = sadd.s32 %s315, 1
      %s317 = scalar_select %p314, %s315, %s316
      %p320 = pneg %p314
      %p321 = scmp.eq.s32.totalorder %s27, 1
      %p322 = por %p320, %p321
      %p323 = scmp.ne.s32.totalorder %s315, %s318
      %p324 = scmp.eq.s32.totalorder %s27, 0
      %p325 = por %p323, %p324
      %p326 = scmp.ne.s32.totalorder %s315, %s318
      %p327 = scmp.eq.s32.totalorder %s32, 1
      %p328 = por %p326, %p327
      %p329 = scmp.ne.s32.totalorder %s318, %s319
      %p330 = scmp.eq.s32.totalorder %s32, 0
      %p331 = por %p329, %p330
      %p332 = scmp.ne.s32.totalorder %s318, %s319
      %p333 = scmp.eq.s32.totalorder %s33, 1
      %p334 = por %p332, %p333
      %p336 = scmp.ne.s32.totalorder %s319, %s335
      %p337 = scmp.eq.s32.totalorder %s33, 0
      %p338 = por %p336, %p337
      %p339 = scmp.le.s32.totalorder 1, %s27
      %p340 = scmp.lt.s32.totalorder %s27, 3
      %p341 = pnand %p339, %p340
      %p342 = pneg %p341
      // Predicated region
      $region9: #{tpu_custom_call.1} parent=5 // pred_check
        _
      $region10: #{tpu_custom_call.1} parent=5 // pred_check_branch
        %344 = sbr.rel (%p341) target = $region12
      $region11: #{tpu_custom_call.1} parent=5 // pred_region
        %s345 = ssub.s32 %s27, 1
        // Predicated region
        $region13: #{tpu_custom_call.1} parent=11 // pred_check
          %p346 = pneg %p74
        $region14: #{tpu_custom_call.1} parent=11 // pred_check_branch
          %348 = sbr.rel (%p346) target = $region16
        $region15: #{tpu_custom_call.1} parent=11 // pred_region
          %350 = vsyncadd [#allocation6], 0
          %s352 = sshll.u32 %s1, 4
          %s353 = int_to_ptr.hbm [resolvable:$true] %s352
          %s354 = sshll.u32 [#allocation5], 4
          %s355 = int_to_ptr.vmem [resolvable:$true] %s354
          %357 = dma.hbm_to_vmem [thread:$0]  %s353, 16, %s355, [#allocation6]
        $region16: #{tpu_custom_call.1} parent=11 // pred_fallthru
          _
        // Predicated region
        $region17: #{tpu_custom_call.1} parent=11 // pred_check
          %p358 = pneg %p95
        $region18: #{tpu_custom_call.1} parent=11 // pred_check_branch
          %360 = sbr.rel (%p358) target = $region20
        $region19: #{tpu_custom_call.1} parent=11 // pred_region
          %362 = vsyncadd [#allocation6], 0
          %s363 = sshll.u32 %s2, 4
          %s364 = int_to_ptr.hbm [resolvable:$true] %s363
          %s365 = sshll.u32 [#allocation7], 4
          %s366 = int_to_ptr.vmem [resolvable:$true] %s365
          %371 = dma.hbm_to_vmem [thread:$0]  %s364, 256, %s366, [#allocation6], 128, 128, 8
        $region20: #{tpu_custom_call.1} parent=11 // pred_fallthru
          _
        // Predicated region
        $region21: #{tpu_custom_call.1} parent=11 // pred_check
          %p372 = pneg %p116
        $region22: #{tpu_custom_call.1} parent=11 // pred_check_branch
          %374 = sbr.rel (%p372) target = $region24
        $region23: #{tpu_custom_call.1} parent=11 // pred_region
          _
        $region24: #{tpu_custom_call.1} parent=11 // pred_fallthru
          _
        // Predicated region
        $region25: #{tpu_custom_call.1} parent=11 // pred_check
          %p375 = pneg %p137
        $region26: #{tpu_custom_call.1} parent=11 // pred_check_branch
          %377 = sbr.rel (%p375) target = $region28
        $region27: #{tpu_custom_call.1} parent=11 // pred_region
          _
        $region28: #{tpu_custom_call.1} parent=11 // pred_fallthru
          _
        // Predicated region
        $region29: #{tpu_custom_call.1} parent=11 // pred_check
          %p378 = pneg %p158
        $region30: #{tpu_custom_call.1} parent=11 // pred_check_branch
          %380 = sbr.rel (%p378) target = $region32
        $region31: #{tpu_custom_call.1} parent=11 // pred_region
          _
        $region32: #{tpu_custom_call.1} parent=11 // pred_fallthru
          _
        // Predicated region
        $region33: #{tpu_custom_call.1} parent=11 // pred_check
          %p381 = pneg %p179
        $region34: #{tpu_custom_call.1} parent=11 // pred_check_branch
          %383 = sbr.rel (%p381) target = $region36
        $region35: #{tpu_custom_call.1} parent=11 // pred_region
          _
        $region36: #{tpu_custom_call.1} parent=11 // pred_fallthru
          _
        // Predicated region
        $region37: #{tpu_custom_call.1} parent=11 // pred_check
          %p384 = pneg %p200
        $region38: #{tpu_custom_call.1} parent=11 // pred_check_branch
          %386 = sbr.rel (%p384) target = $region40
        $region39: #{tpu_custom_call.1} parent=11 // pred_region
          _
        $region40: #{tpu_custom_call.1} parent=11 // pred_fallthru
          _
        // Predicated region
        $region41: #{tpu_custom_call.1} parent=11 // pred_check
          %p387 = pneg %p221
        $region42: #{tpu_custom_call.1} parent=11 // pred_check_branch
          %389 = sbr.rel (%p387) target = $region44
        $region43: #{tpu_custom_call.1} parent=11 // pred_region
          _
        $region44: #{tpu_custom_call.1} parent=11 // pred_fallthru
          _
        // Predicated region
        $region45: #{tpu_custom_call.1} parent=11 // pred_check
          %p390 = pneg %p242
        $region46: #{tpu_custom_call.1} parent=11 // pred_check_branch
          %392 = sbr.rel (%p390) target = $region48
        $region47: #{tpu_custom_call.1} parent=11 // pred_region
          %394 = vsyncadd [#allocation9], 0
          %s395 = sshll.u32 %s9, 4
          %s396 = int_to_ptr.hbm [resolvable:$true] %s395
          %s397 = sshll.u32 [#allocation8], 4
          %s398 = int_to_ptr.vmem [resolvable:$true] %s397
          %403 = dma.hbm_to_vmem [thread:$0]  %s396, 512, %s398, [#allocation9], 128, 128, 8
        $region48: #{tpu_custom_call.1} parent=11 // pred_fallthru
          _
        // Predicated region
        $region49: #{tpu_custom_call.1} parent=11 // pred_check
          %p404 = pneg %p263
        $region50: #{tpu_custom_call.1} parent=11 // pred_check_branch
          %406 = sbr.rel (%p404) target = $region52
        $region51: #{tpu_custom_call.1} parent=11 // pred_region
          _
        $region52: #{tpu_custom_call.1} parent=11 // pred_fallthru
          _
        // Predicated region
        $region53: #{tpu_custom_call.1} parent=11 // pred_check
          %p407 = pneg %p284
        $region54: #{tpu_custom_call.1} parent=11 // pred_check_branch
          %409 = sbr.rel (%p407) target = $region56
        $region55: #{tpu_custom_call.1} parent=11 // pred_region
          _
        $region56: #{tpu_custom_call.1} parent=11 // pred_fallthru
          _
        // Predicated region
        $region57: #{tpu_custom_call.1} parent=11 // pred_check
          %p410 = pneg %p305
        $region58: #{tpu_custom_call.1} parent=11 // pred_check_branch
          %412 = sbr.rel (%p410) target = $region60
        $region59: #{tpu_custom_call.1} parent=11 // pred_region
          _
        $region60: #{tpu_custom_call.1} parent=11 // pred_fallthru
          _
      $region12: #{tpu_custom_call.1} parent=5 // pred_fallthru
        _
      %p413 = scmp.lt.s32.totalorder %s27, 2
      // Predicated region
      $region61: #{tpu_custom_call.1} parent=5 // pred_check
        %p414 = pneg %p413
      $region62: #{tpu_custom_call.1} parent=5 // pred_check_branch
        %416 = sbr.rel (%p414) target = $region64
      $region63: #{tpu_custom_call.1} parent=5 // pred_region
        // Predicated region
        $region65: #{tpu_custom_call.1} parent=63 // pred_check
          %p417 = pneg %p47
        $region66: #{tpu_custom_call.1} parent=63 // pred_check_branch
          %419 = sbr.rel (%p417) target = $region68
        $region67: #{tpu_custom_call.1} parent=63 // pred_region
          %s420 = sand.u32 %s37, 1
          %s421 = scalar_lea.sflag [#allocation3], %s420
          %s422 = sand.u32 %s37, 1
          %s423 = smul.addr %s422, 128
          %s424 = scalar_lea.vmem [#allocation2], %s423
          %s425 = smul.u32 8, %s27
          %427 = vsyncadd %s421, 0
          %s428 = smul.addr %s425, 2
          %s429 = smul.addr %s428, 8
          %s430 = scalar_lea.hbm %s0, %s429
          %s431 = sshll.u32 %s430, 4
          %s432 = int_to_ptr.hbm [resolvable:$true] %s431
          %s433 = sshll.u32 %s424, 4
          %s434 = int_to_ptr.vmem [resolvable:$true] %s433
          %439 = dma.hbm_to_vmem [thread:$0]  %s432, 2048, %s434, %s421, 128, 128, 8
        $region68: #{tpu_custom_call.1} parent=63 // pred_fallthru
          _
      $region64: #{tpu_custom_call.1} parent=5 // pred_fallthru
        _
      %p440 = scmp.le.s32.totalorder 1, %s27
      %p441 = scmp.lt.s32.totalorder %s27, 3
      %p442 = pnand %p440, %p441
      %p443 = pneg %p442
      // Predicated region
      $region69: #{tpu_custom_call.1} parent=5 // pred_check
        _
      $region70: #{tpu_custom_call.1} parent=5 // pred_check_branch
        %445 = sbr.rel (%p442) target = $region72
      $region71: #{tpu_custom_call.1} parent=5 // pred_region
        %s446 = ssub.s32 %s27, 1
        %s447 = sand.u32 %s40, 1
        %s448 = scalar_lea.sflag [#allocation3], %s447
        %s449 = sand.u32 %s40, 1
        %s450 = smul.addr %s449, 128
        %s451 = scalar_lea.vmem [#allocation2], %s450
        // Predicated region
        $region73: #{tpu_custom_call.1} parent=71 // pred_check
          %p452 = pneg %p53
        $region74: #{tpu_custom_call.1} parent=71 // pred_check_branch
          %454 = sbr.rel (%p452) target = $region76
        $region75: #{tpu_custom_call.1} parent=71 // pred_region
          %456 = dma.done %s448, 2048
        $region76: #{tpu_custom_call.1} parent=71 // pred_fallthru
          _
        // Predicated region
        $region77: #{tpu_custom_call.1} parent=71 // pred_check
          %p457 = pneg %p74
        $region78: #{tpu_custom_call.1} parent=71 // pred_check_branch
          %459 = sbr.rel (%p457) target = $region80
        $region79: #{tpu_custom_call.1} parent=71 // pred_region
          %461 = dma.done [#allocation6], 16
        $region80: #{tpu_custom_call.1} parent=71 // pred_fallthru
          _
        // Predicated region
        $region81: #{tpu_custom_call.1} parent=71 // pred_check
          %p462 = pneg %p95
        $region82: #{tpu_custom_call.1} parent=71 // pred_check_branch
          %464 = sbr.rel (%p462) target = $region84
        $region83: #{tpu_custom_call.1} parent=71 // pred_region
          %466 = dma.done [#allocation6], 256
        $region84: #{tpu_custom_call.1} parent=71 // pred_fallthru
          _
        // Predicated region
        $region85: #{tpu_custom_call.1} parent=71 // pred_check
          %p467 = pneg %p242
        $region86: #{tpu_custom_call.1} parent=71 // pred_check_branch
          %469 = sbr.rel (%p467) target = $region88
        $region87: #{tpu_custom_call.1} parent=71 // pred_region
          %471 = dma.done [#allocation9], 512
        $region88: #{tpu_custom_call.1} parent=71 // pred_fallthru
          _
        %s472 = sand.u32 %s40, 1
        %s473 = scalar_lea.sflag [#allocation3], %s472
        %s474 = sand.u32 %s40, 1
        %s475 = smul.addr %s474, 128
        %s476 = scalar_lea.vmem [#allocation2], %s475
        %p477 = pneg %p53
        %p478 = pneg %p50
        %p479 = pneg %p74
        %p480 = pneg %p71
        %p481 = pneg %p95
        %p482 = pneg %p92
        %p483 = pneg %p116
        %p484 = pneg %p113
        %p485 = pneg %p137
        %p486 = pneg %p134
        %p487 = pneg %p158
        %p488 = pneg %p155
        %p489 = pneg %p179
        %p490 = pneg %p176
        %p491 = pneg %p200
        %p492 = pneg %p197
        %p493 = pneg %p221
        %p494 = pneg %p218
        %p495 = pneg %p242
        %p496 = pneg %p239
        %p497 = pneg %p263
        %p498 = pneg %p260
        %p499 = pneg %p284
        %p500 = pneg %p281
        %p501 = pneg %p305
        %p502 = pneg %p302
        %p503 = pneg %p331
        %p504 = pneg %p328
        %s505 = sand.u32 %s318, 1
        %s506 = scalar_lea.sflag [#allocation4], %s505
        %s507 = sand.u32 %s318, 1
        %s508 = smul.addr %s507, 8
        %s509 = scalar_lea.vmem [#allocation10], %s508
        %s510 = smul.u32 8, %s32
        %v511 = vld [vmem:[%s451] sm:$0xff]
        %v512 = vld [vmem:[%s451 + $0x8] sm:$0xff]
        %v513 = vld [vmem:[%s451 + $0x10] sm:$0xff]
        %v514 = vld [vmem:[%s451 + $0x18] sm:$0xff]
        %v515 = vld [vmem:[%s451 + $0x20] sm:$0xff]
        %v516 = vld [vmem:[%s451 + $0x28] sm:$0xff]
        %v517 = vld [vmem:[%s451 + $0x30] sm:$0xff]
        %v518 = vld [vmem:[%s451 + $0x38] sm:$0xff]
        %v519 = vld [vmem:[%s451 + $0x40] sm:$0xff]
        %v520 = vld [vmem:[%s451 + $0x48] sm:$0xff]
        %v521 = vld [vmem:[%s451 + $0x50] sm:$0xff]
        %v522 = vld [vmem:[%s451 + $0x58] sm:$0xff]
        %v523 = vld [vmem:[%s451 + $0x60] sm:$0xff]
        %v524 = vld [vmem:[%s451 + $0x68] sm:$0xff]
        %v525 = vld [vmem:[%s451 + $0x70] sm:$0xff]
        %v526 = vld [vmem:[%s451 + $0x78] sm:$0xff]
        %vm527 = vcmask 261120
        %v528 = vsel %vm527, %v511, 0.0
        %v529 = vsel %vm527, %v512, 0.0
        %v530 = vadd.f32 %v528, %v529
        %v531 = vrot.slane %v530, 4
        %v532 = vadd.f32 %v530, %v531
        %v533 = vrot.slane %v532, 2
        %v534 = vadd.f32 %v532, %v533
        %v535 = vrot.slane %v534, 1
        %v536 = vadd.f32 %v534, %v535
        %v537 = vsel %vm527, %v513, 0.0
        %v538 = vsel %vm527, %v514, 0.0
        %v539 = vadd.f32 %v537, %v538
        %v540 = vrot.slane %v539, 4
        %v541 = vadd.f32 %v539, %v540
        %v542 = vrot.slane %v541, 2
        %v543 = vadd.f32 %v541, %v542
        %v544 = vrot.slane %v543, 1
        %v545 = vadd.f32 %v543, %v544
        %v546 = vsel %vm527, %v515, 0.0
        %v547 = vsel %vm527, %v516, 0.0
        %v548 = vadd.f32 %v546, %v547
        %v549 = vrot.slane %v548, 4
        %v550 = vadd.f32 %v548, %v549
        %v551 = vrot.slane %v550, 2
        %v552 = vadd.f32 %v550, %v551
        %v553 = vrot.slane %v552, 1
        %v554 = vadd.f32 %v552, %v553
        %v555 = vsel %vm527, %v517, 0.0
        %v556 = vsel %vm527, %v518, 0.0
        %v557 = vadd.f32 %v555, %v556
        %v558 = vrot.slane %v557, 4
        %v559 = vadd.f32 %v557, %v558
        %v560 = vrot.slane %v559, 2
        %v561 = vadd.f32 %v559, %v560
        %v562 = vrot.slane %v561, 1
        %v563 = vadd.f32 %v561, %v562
        %v564 = vsel %vm527, %v519, 0.0
        %v565 = vsel %vm527, %v520, 0.0
        %v566 = vadd.f32 %v564, %v565
        %v567 = vrot.slane %v566, 4
        %v568 = vadd.f32 %v566, %v567
        %v569 = vrot.slane %v568, 2
        %v570 = vadd.f32 %v568, %v569
        %v571 = vrot.slane %v570, 1
        %v572 = vadd.f32 %v570, %v571
        %v573 = vsel %vm527, %v521, 0.0
        %v574 = vsel %vm527, %v522, 0.0
        %v575 = vadd.f32 %v573, %v574
        %v576 = vrot.slane %v575, 4
        %v577 = vadd.f32 %v575, %v576
        %v578 = vrot.slane %v577, 2
        %v579 = vadd.f32 %v577, %v578
        %v580 = vrot.slane %v579, 1
        %v581 = vadd.f32 %v579, %v580
        %v582 = vsel %vm527, %v523, 0.0
        %v583 = vsel %vm527, %v524, 0.0
        %v584 = vadd.f32 %v582, %v583
        %v585 = vrot.slane %v584, 4
        %v586 = vadd.f32 %v584, %v585
        %v587 = vrot.slane %v586, 2
        %v588 = vadd.f32 %v586, %v587
        %v589 = vrot.slane %v588, 1
        %v590 = vadd.f32 %v588, %v589
        %v591 = vsel %vm527, %v525, 0.0
        %v592 = vsel %vm527, %v526, 0.0
        %v593 = vadd.f32 %v591, %v592
        %v594 = vrot.slane %v593, 4
        %v595 = vadd.f32 %v593, %v594
        %v596 = vrot.slane %v595, 2
        %v597 = vadd.f32 %v595, %v596
        %v598 = vrot.slane %v597, 1
        %v599 = vadd.f32 %v597, %v598
        %v600 = vrcp.pop 16.0
        %v601 = vmul.f32 16.0, %v600
        %v602 = vsub.f32 1.0, %v601
        %v603 = vmul.f32 %v600, %v602
        %v604 = vadd.f32 %v600, %v603
        %vm605 = vweird.f32 %v600
        %v606 = vsel %vm605, %v600, %v604
        %v607 = vmul.f32 %v536, %v606
        %v608 = vmul.f32 %v545, %v606
        %v609 = vmul.f32 %v554, %v606
        %v610 = vmul.f32 %v563, %v606
        %v611 = vmul.f32 %v572, %v606
        %v612 = vmul.f32 %v581, %v606
        %v613 = vmul.f32 %v590, %v606
        %v614 = vmul.f32 %v599, %v606
        %v615 = vld [vmem:[#allocation5] sm:$0x1]
        %v617 = vperm.slane %v615, 0
        %v619 = vadd.f32 %v607, %v617
        %v620 = vadd.f32 %v608, %v617
        %v621 = vadd.f32 %v609, %v617
        %v622 = vadd.f32 %v610, %v617
        %v623 = vadd.f32 %v611, %v617
        %v624 = vadd.f32 %v612, %v617
        %v625 = vadd.f32 %v613, %v617
        %v626 = vadd.f32 %v614, %v617
        %v627 = vld [vmem:[#allocation7] sm:$0xff]
        %v628 = vld [vmem:[#allocation7 + $0x8] sm:$0xff]
        %v629 = vadd.f32 %v511, %v627
        %v630 = vadd.f32 %v512, %v628
        %v631 = vadd.f32 %v513, %v627
        %v632 = vadd.f32 %v514, %v628
        %v633 = vadd.f32 %v515, %v627
        %v634 = vadd.f32 %v516, %v628
        %v635 = vadd.f32 %v517, %v627
        %v636 = vadd.f32 %v518, %v628
        %v637 = vadd.f32 %v519, %v627
        %v638 = vadd.f32 %v520, %v628
        %v639 = vadd.f32 %v521, %v627
        %v640 = vadd.f32 %v522, %v628
        %v641 = vadd.f32 %v523, %v627
        %v642 = vadd.f32 %v524, %v628
        %v643 = vadd.f32 %v525, %v627
        %v644 = vadd.f32 %v526, %v628
        %v645 = vld [vmem:[%s5] sm:$0xff]
        %v646 = vld [vmem:[%s5 + $0x8] sm:$0xff]
        %v647 = vld [vmem:[%s5 + $0x10] sm:$0xff]
        %v648 = vld [vmem:[%s5 + $0x18] sm:$0xff]
        %v649 = vld [vmem:[%s6] sm:$0x1]
        %v651 = vperm.slane %v649, 0
        %v661 = vrot.slane %v620, 7
        %vm662 = vcmask 1041409
        %v663 = vsel %vm662, %v661, %v619
        %v664 = vrot.slane %v621, 6
        %vm665 = vcmask 1042434
        %v666 = vsel %vm665, %v664, %v663
        %v667 = vrot.slane %v622, 5
        %vm668 = vcmask 1043459
        %v669 = vsel %vm668, %v667, %v666
        %v670 = vrot.slane %v623, 4
        %vm671 = vcmask 1044484
        %v672 = vsel %vm671, %v670, %v669
        %v673 = vrot.slane %v624, 3
        %vm674 = vcmask 1045509
        %v675 = vsel %vm674, %v673, %v672
        %v676 = vrot.slane %v625, 2
        %vm677 = vcmask 1046534
        %v678 = vsel %vm677, %v676, %v675
        %v679 = vrot.slane %v626, 1
        %vm680 = vcmask 1047559
        %v681 = vsel %vm680, %v679, %v678
        %v682 = vsel %vm527, %v681, 0
        %684 = vmatpush.msra.mxu0 0.0
        %685 = vmatpush.msra.mxu0 0.0
        %686 = vmatpush.msra.mxu0 0.0
        %687 = vmatpush.msra.mxu0 0.0
        %688 = vmatpush.msra.mxu0 0.0
        %689 = vmatpush.msra.mxu0 0.0
        %690 = vmatpush.msra.mxu0 0.0
        %691 = vmatpush.msra.mxu0 0.0
        %692 = vmatpush.msra.mxu0 0.0
        %693 = vmatpush.msra.mxu0 0.0
        %694 = vmatpush.msra.mxu0 0.0
        %695 = vmatpush.msra.mxu0 0.0
        %696 = vmatpush.msra.mxu0 %v648
        %697 = vmatpush.msra.mxu0 %v647
        %698 = vmatpush.msra.mxu0 %v646
        %699 = vmatpush.msra.mxu0 %v645
        %700 = vmatmul.f32.gmra.mxu0 %v682
        %v701 = vpop.f32.mrf.mxu0
        %v702 = vadd.f32 %v651, %v701
        %703 = vdwg.mxu0
        %v704 = vld [vmem:[%s7] sm:$0xff]
        %v705 = vld [vmem:[%s7 + $0x8] sm:$0xff]
        %v706 = vld [vmem:[%s7 + $0x10] sm:$0xff]
        %v707 = vld [vmem:[%s7 + $0x18] sm:$0xff]
        %v708 = vld [vmem:[%s8] sm:$0x1]
        %v710 = vperm.slane %v708, 0
        %712 = vmatpush.msra.mxu0 0.0
        %713 = vmatpush.msra.mxu0 0.0
        %714 = vmatpush.msra.mxu0 0.0
        %715 = vmatpush.msra.mxu0 0.0
        %716 = vmatpush.msra.mxu0 0.0
        %717 = vmatpush.msra.mxu0 0.0
        %718 = vmatpush.msra.mxu0 0.0
        %719 = vmatpush.msra.mxu0 0.0
        %720 = vmatpush.msra.mxu0 0.0
        %721 = vmatpush.msra.mxu0 0.0
        %722 = vmatpush.msra.mxu0 0.0
        %723 = vmatpush.msra.mxu0 0.0
        %724 = vmatpush.msra.mxu0 %v707
        %725 = vmatpush.msra.mxu0 %v706
        %726 = vmatpush.msra.mxu0 %v705
        %727 = vmatpush.msra.mxu0 %v704
        %728 = vmatmul.f32.gmra.mxu0 %v682
        %v729 = vpop.f32.mrf.mxu0
        %v730 = vadd.f32 %v710, %v729
        %731 = vdwg.mxu0
        %v732 = vld [vmem:[#allocation8] sm:$0xff]
        %v733 = vld [vmem:[#allocation8 + $0x8] sm:$0xff]
        %v734 = vld [vmem:[#allocation8 + $0x10] sm:$0xff]
        %v735 = vld [vmem:[#allocation8 + $0x18] sm:$0xff]
        %v736 = vld [vmem:[%s10] sm:$0x1]
        %v738 = vperm.slane %v736, 0
        %740 = vmatpush.msra.mxu0 0.0
        %741 = vmatpush.msra.mxu0 0.0
        %742 = vmatpush.msra.mxu0 0.0
        %743 = vmatpush.msra.mxu0 0.0
        %744 = vmatpush.msra.mxu0 0.0
        %745 = vmatpush.msra.mxu0 0.0
        %746 = vmatpush.msra.mxu0 0.0
        %747 = vmatpush.msra.mxu0 0.0
        %748 = vmatpush.msra.mxu0 0.0
        %749 = vmatpush.msra.mxu0 0.0
        %750 = vmatpush.msra.mxu0 0.0
        %751 = vmatpush.msra.mxu0 0.0
        %752 = vmatpush.msra.mxu0 %v735
        %753 = vmatpush.msra.mxu0 %v734
        %754 = vmatpush.msra.mxu0 %v733
        %755 = vmatpush.msra.mxu0 %v732
        %756 = vmatmul.f32.gmra.mxu0 %v682
        %v757 = vpop.f32.mrf.mxu0
        %v758 = vadd.f32 %v738, %v757
        %759 = vdwg.mxu0
        %v761 = vsel %vm527, %v629, 0
        %v764 = vsel %vm527, %v630, 0
        %v767 = vsel %vm527, %v631, 0
        %v770 = vsel %vm527, %v632, 0
        %v773 = vsel %vm527, %v633, 0
        %v776 = vsel %vm527, %v634, 0
        %v779 = vsel %vm527, %v635, 0
        %v782 = vsel %vm527, %v636, 0
        %v785 = vsel %vm527, %v637, 0
        %v788 = vsel %vm527, %v638, 0
        %v791 = vsel %vm527, %v639, 0
        %v794 = vsel %vm527, %v640, 0
        %v797 = vsel %vm527, %v641, 0
        %v800 = vsel %vm527, %v642, 0
        %v803 = vsel %vm527, %v643, 0
        %v806 = vsel %vm527, %v644, 0
        %808 = vmatpush.msra.mxu0 0.0
        %809 = vmatpush.msra.mxu0 0.0
        %810 = vmatpush.msra.mxu0 0.0
        %811 = vmatpush.msra.mxu0 0.0
        %812 = vmatpush.msra.mxu0 0.0
        %813 = vmatpush.msra.mxu0 0.0
        %814 = vmatpush.msra.mxu0 0.0
        %815 = vmatpush.msra.mxu0 0.0
        %816 = vmatpush.msra.mxu0 0.0
        %817 = vmatpush.msra.mxu0 0.0
        %818 = vmatpush.msra.mxu0 0.0
        %819 = vmatpush.msra.mxu0 0.0
        %820 = vmatpush.msra.mxu0 %v707
        %821 = vmatpush.msra.mxu0 %v706
        %822 = vmatpush.msra.mxu0 %v705
        %823 = vmatpush.msra.mxu0 %v704
        %824 = vmatmul.f32.gmra.mxu0 %v761
        %v825 = vpop.f32.mrf.mxu0
        %v826 = vadd.f32 %v710, %v825
        %827 = vmatmul.f32.gmra.mxu0 %v764
        %v828 = vpop.f32.mrf.mxu0
        %v829 = vadd.f32 %v710, %v828
        %830 = vmatmul.f32.gmra.mxu0 %v767
        %v831 = vpop.f32.mrf.mxu0
        %v832 = vadd.f32 %v710, %v831
        %833 = vmatmul.f32.gmra.mxu0 %v770
        %v834 = vpop.f32.mrf.mxu0
        %v835 = vadd.f32 %v710, %v834
        %836 = vmatmul.f32.gmra.mxu0 %v773
        %v837 = vpop.f32.mrf.mxu0
        %v838 = vadd.f32 %v710, %v837
        %839 = vmatmul.f32.gmra.mxu0 %v776
        %v840 = vpop.f32.mrf.mxu0
        %v841 = vadd.f32 %v710, %v840
        %842 = vmatmul.f32.gmra.mxu0 %v779
        %v843 = vpop.f32.mrf.mxu0
        %v844 = vadd.f32 %v710, %v843
        %845 = vmatmul.f32.gmra.mxu0 %v782
        %v846 = vpop.f32.mrf.mxu0
        %v847 = vadd.f32 %v710, %v846
        %848 = vmatmul.f32.gmra.mxu0 %v785
        %v849 = vpop.f32.mrf.mxu0
        %v850 = vadd.f32 %v710, %v849
        %851 = vmatmul.f32.gmra.mxu0 %v788
        %v852 = vpop.f32.mrf.mxu0
        %v853 = vadd.f32 %v710, %v852
        %854 = vmatmul.f32.gmra.mxu0 %v791
        %v855 = vpop.f32.mrf.mxu0
        %v856 = vadd.f32 %v710, %v855
        %857 = vmatmul.f32.gmra.mxu0 %v794
        %v858 = vpop.f32.mrf.mxu0
        %v859 = vadd.f32 %v710, %v858
        %860 = vmatmul.f32.gmra.mxu0 %v797
        %v861 = vpop.f32.mrf.mxu0
        %v862 = vadd.f32 %v710, %v861
        %863 = vmatmul.f32.gmra.mxu0 %v800
        %v864 = vpop.f32.mrf.mxu0
        %v865 = vadd.f32 %v710, %v864
        %866 = vmatmul.f32.gmra.mxu0 %v803
        %v867 = vpop.f32.mrf.mxu0
        %v868 = vadd.f32 %v710, %v867
        %869 = vmatmul.f32.gmra.mxu0 %v806
        %v870 = vpop.f32.mrf.mxu0
        %v871 = vadd.f32 %v710, %v870
        %872 = vdwg.mxu0
        %873 = vmatpush.msra.mxu0 0.0
        %874 = vmatpush.msra.mxu0 0.0
        %875 = vmatpush.msra.mxu0 0.0
        %876 = vmatpush.msra.mxu0 0.0
        %877 = vmatpush.msra.mxu0 0.0
        %878 = vmatpush.msra.mxu0 0.0
        %879 = vmatpush.msra.mxu0 0.0
        %880 = vmatpush.msra.mxu0 0.0
        %881 = vmatpush.msra.mxu0 0.0
        %882 = vmatpush.msra.mxu0 0.0
        %883 = vmatpush.msra.mxu0 0.0
        %884 = vmatpush.msra.mxu0 0.0
        %885 = vmatpush.msra.mxu0 %v735
        %886 = vmatpush.msra.mxu0 %v734
        %887 = vmatpush.msra.mxu0 %v733
        %888 = vmatpush.msra.mxu0 %v732
        %889 = vmatmul.f32.gmra.mxu0 %v761
        %v890 = vpop.f32.mrf.mxu0
        %v891 = vadd.f32 %v738, %v890
        %892 = vmatmul.f32.gmra.mxu0 %v764
        %v893 = vpop.f32.mrf.mxu0
        %v894 = vadd.f32 %v738, %v893
        %895 = vmatmul.f32.gmra.mxu0 %v767
        %v896 = vpop.f32.mrf.mxu0
        %v897 = vadd.f32 %v738, %v896
        %898 = vmatmul.f32.gmra.mxu0 %v770
        %v899 = vpop.f32.mrf.mxu0
        %v900 = vadd.f32 %v738, %v899
        %901 = vmatmul.f32.gmra.mxu0 %v773
        %v902 = vpop.f32.mrf.mxu0
        %v903 = vadd.f32 %v738, %v902
        %904 = vmatmul.f32.gmra.mxu0 %v776
        %v905 = vpop.f32.mrf.mxu0
        %v906 = vadd.f32 %v738, %v905
        %907 = vmatmul.f32.gmra.mxu0 %v779
        %v908 = vpop.f32.mrf.mxu0
        %v909 = vadd.f32 %v738, %v908
        %910 = vmatmul.f32.gmra.mxu0 %v782
        %v911 = vpop.f32.mrf.mxu0
        %v912 = vadd.f32 %v738, %v911
        %913 = vmatmul.f32.gmra.mxu0 %v785
        %v914 = vpop.f32.mrf.mxu0
        %v915 = vadd.f32 %v738, %v914
        %916 = vmatmul.f32.gmra.mxu0 %v788
        %v917 = vpop.f32.mrf.mxu0
        %v918 = vadd.f32 %v738, %v917
        %919 = vmatmul.f32.gmra.mxu0 %v791
        %v920 = vpop.f32.mrf.mxu0
        %v921 = vadd.f32 %v738, %v920
        %922 = vmatmul.f32.gmra.mxu0 %v794
        %v923 = vpop.f32.mrf.mxu0
        %v924 = vadd.f32 %v738, %v923
        %925 = vmatmul.f32.gmra.mxu0 %v797
        %v926 = vpop.f32.mrf.mxu0
        %v927 = vadd.f32 %v738, %v926
        %928 = vmatmul.f32.gmra.mxu0 %v800
        %v929 = vpop.f32.mrf.mxu0
        %v930 = vadd.f32 %v738, %v929
        %931 = vmatmul.f32.gmra.mxu0 %v803
        %v932 = vpop.f32.mrf.mxu0
        %v933 = vadd.f32 %v738, %v932
        %934 = vmatmul.f32.gmra.mxu0 %v806
        %v935 = vpop.f32.mrf.mxu0
        %v936 = vadd.f32 %v738, %v935
        %937 = vdwg.mxu0
        %v939 = vrot.slane %v702, 1
        %v940 = vrot.slane %v702, 2
        %v941 = vrot.slane %v702, 3
        %v942 = vrot.slane %v702, 4
        %v943 = vrot.slane %v702, 5
        %v944 = vrot.slane %v702, 6
        %v945 = vrot.slane %v702, 7
        %v946 = vperm.slane %v702, 0
        %v947 = vperm.slane %v939, 0
        %v948 = vperm.slane %v940, 0
        %v949 = vperm.slane %v941, 0
        %v950 = vperm.slane %v942, 0
        %v951 = vperm.slane %v943, 0
        %v952 = vperm.slane %v944, 0
        %v953 = vperm.slane %v945, 0
        %v962 = vmul.f32 %v946, %v826
        %v963 = vmul.f32 %v946, %v829
        %v964 = vmul.f32 %v947, %v832
        %v965 = vmul.f32 %v947, %v835
        %v966 = vmul.f32 %v948, %v838
        %v967 = vmul.f32 %v948, %v841
        %v968 = vmul.f32 %v949, %v844
        %v969 = vmul.f32 %v949, %v847
        %v970 = vmul.f32 %v950, %v850
        %v971 = vmul.f32 %v950, %v853
        %v972 = vmul.f32 %v951, %v856
        %v973 = vmul.f32 %v951, %v859
        %v974 = vmul.f32 %v952, %v862
        %v975 = vmul.f32 %v952, %v865
        %v976 = vmul.f32 %v953, %v868
        %v977 = vmul.f32 %v953, %v871
        %v978 = vld [vmem:[%s3] sm:$0xff]
        %v979 = vld [vmem:[%s3 + $0x8] sm:$0xff]
        %v980 = vld [vmem:[%s3 + $0x10] sm:$0xff]
        %v981 = vld [vmem:[%s3 + $0x18] sm:$0xff]
        %v983 = vsel %vm527, %v962, 0
        %v986 = vsel %vm527, %v963, 0
        %v989 = vsel %vm527, %v964, 0
        %v992 = vsel %vm527, %v965, 0
        %v995 = vsel %vm527, %v966, 0
        %v998 = vsel %vm527, %v967, 0
        %v1001 = vsel %vm527, %v968, 0
        %v1004 = vsel %vm527, %v969, 0
        %v1007 = vsel %vm527, %v970, 0
        %v1010 = vsel %vm527, %v971, 0
        %v1013 = vsel %vm527, %v972, 0
        %v1016 = vsel %vm527, %v973, 0
        %v1019 = vsel %vm527, %v974, 0
        %v1022 = vsel %vm527, %v975, 0
        %v1025 = vsel %vm527, %v976, 0
        %v1028 = vsel %vm527, %v977, 0
        %1030 = vmatpush.msra.mxu0 0.0
        %1031 = vmatpush.msra.mxu0 0.0
        %1032 = vmatpush.msra.mxu0 0.0
        %1033 = vmatpush.msra.mxu0 0.0
        %1034 = vmatpush.msra.mxu0 0.0
        %1035 = vmatpush.msra.mxu0 0.0
        %1036 = vmatpush.msra.mxu0 0.0
        %1037 = vmatpush.msra.mxu0 0.0
        %1038 = vmatpush.msra.mxu0 0.0
        %1039 = vmatpush.msra.mxu0 0.0
        %1040 = vmatpush.msra.mxu0 0.0
        %1041 = vmatpush.msra.mxu0 0.0
        %1042 = vmatpush.msra.mxu0 %v981
        %1043 = vmatpush.msra.mxu0 %v980
        %1044 = vmatpush.msra.mxu0 %v979
        %1045 = vmatpush.msra.mxu0 %v978
        %1046 = vmatmul.f32.gmra.mxu0 %v983
        %v1047 = vpop.f32.mrf.mxu0
        %v1048 = vadd.f32 0.0, %v1047
        %1049 = vmatmul.f32.gmra.mxu0 %v986
        %v1050 = vpop.f32.mrf.mxu0
        %v1051 = vadd.f32 0.0, %v1050
        %1052 = vmatmul.f32.gmra.mxu0 %v989
        %v1053 = vpop.f32.mrf.mxu0
        %v1054 = vadd.f32 0.0, %v1053
        %1055 = vmatmul.f32.gmra.mxu0 %v992
        %v1056 = vpop.f32.mrf.mxu0
        %v1057 = vadd.f32 0.0, %v1056
        %1058 = vmatmul.f32.gmra.mxu0 %v995
        %v1059 = vpop.f32.mrf.mxu0
        %v1060 = vadd.f32 0.0, %v1059
        %1061 = vmatmul.f32.gmra.mxu0 %v998
        %v1062 = vpop.f32.mrf.mxu0
        %v1063 = vadd.f32 0.0, %v1062
        %1064 = vmatmul.f32.gmra.mxu0 %v1001
        %v1065 = vpop.f32.mrf.mxu0
        %v1066 = vadd.f32 0.0, %v1065
        %1067 = vmatmul.f32.gmra.mxu0 %v1004
        %v1068 = vpop.f32.mrf.mxu0
        %v1069 = vadd.f32 0.0, %v1068
        %1070 = vmatmul.f32.gmra.mxu0 %v1007
        %v1071 = vpop.f32.mrf.mxu0
        %v1072 = vadd.f32 0.0, %v1071
        %1073 = vmatmul.f32.gmra.mxu0 %v1010
        %v1074 = vpop.f32.mrf.mxu0
        %v1075 = vadd.f32 0.0, %v1074
        %1076 = vmatmul.f32.gmra.mxu0 %v1013
        %v1077 = vpop.f32.mrf.mxu0
        %v1078 = vadd.f32 0.0, %v1077
        %1079 = vmatmul.f32.gmra.mxu0 %v1016
        %v1080 = vpop.f32.mrf.mxu0
        %v1081 = vadd.f32 0.0, %v1080
        %1082 = vmatmul.f32.gmra.mxu0 %v1019
        %v1083 = vpop.f32.mrf.mxu0
        %v1084 = vadd.f32 0.0, %v1083
        %1085 = vmatmul.f32.gmra.mxu0 %v1022
        %v1086 = vpop.f32.mrf.mxu0
        %v1087 = vadd.f32 0.0, %v1086
        %1088 = vmatmul.f32.gmra.mxu0 %v1025
        %v1089 = vpop.f32.mrf.mxu0
        %v1090 = vadd.f32 0.0, %v1089
        %1091 = vmatmul.f32.gmra.mxu0 %v1028
        %v1092 = vpop.f32.mrf.mxu0
        %v1093 = vadd.f32 0.0, %v1092
        %1094 = vdwg.mxu0
        %v1095 = vmul.f32 %v702, %v730
        %v1097 = vsel %vm527, %v1095, 0
        %1099 = vmatpush.msra.mxu0 0.0
        %1100 = vmatpush.msra.mxu0 0.0
        %1101 = vmatpush.msra.mxu0 0.0
        %1102 = vmatpush.msra.mxu0 0.0
        %1103 = vmatpush.msra.mxu0 0.0
        %1104 = vmatpush.msra.mxu0 0.0
        %1105 = vmatpush.msra.mxu0 0.0
        %1106 = vmatpush.msra.mxu0 0.0
        %1107 = vmatpush.msra.mxu0 0.0
        %1108 = vmatpush.msra.mxu0 0.0
        %1109 = vmatpush.msra.mxu0 0.0
        %1110 = vmatpush.msra.mxu0 0.0
        %1111 = vmatpush.msra.mxu0 %v981
        %1112 = vmatpush.msra.mxu0 %v980
        %1113 = vmatpush.msra.mxu0 %v979
        %1114 = vmatpush.msra.mxu0 %v978
        %1115 = vmatmul.f32.gmra.mxu0 %v1097
        %v1116 = vpop.f32.mrf.mxu0
        %v1117 = vadd.f32 0.0, %v1116
        %1118 = vdwg.mxu0
        %vm1119 = vcmask 31744
        %v1120 = vsel %vm1119, %v1048, -inf
        %v1121 = vsel %vm1119, %v1051, -inf
        %v1122 = vmax.f32 %v1120, %v1121
        %v1123 = vrot.slane %v1122, 4
        %v1124 = vmax.f32 %v1122, %v1123
        %v1125 = vrot.slane %v1124, 2
        %v1126 = vmax.f32 %v1124, %v1125
        %v1127 = vrot.slane %v1126, 1
        %v1128 = vmax.f32 %v1126, %v1127
        %v1129 = vsel %vm1119, %v1054, -inf
        %v1130 = vsel %vm1119, %v1057, -inf
        %v1131 = vmax.f32 %v1129, %v1130
        %v1132 = vrot.slane %v1131, 4
        %v1133 = vmax.f32 %v1131, %v1132
        %v1134 = vrot.slane %v1133, 2
        %v1135 = vmax.f32 %v1133, %v1134
        %v1136 = vrot.slane %v1135, 1
        %v1137 = vmax.f32 %v1135, %v1136
        %v1138 = vsel %vm1119, %v1060, -inf
        %v1139 = vsel %vm1119, %v1063, -inf
        %v1140 = vmax.f32 %v1138, %v1139
        %v1141 = vrot.slane %v1140, 4
        %v1142 = vmax.f32 %v1140, %v1141
        %v1143 = vrot.slane %v1142, 2
        %v1144 = vmax.f32 %v1142, %v1143
        %v1145 = vrot.slane %v1144, 1
        %v1146 = vmax.f32 %v1144, %v1145
        %v1147 = vsel %vm1119, %v1066, -inf
        %v1148 = vsel %vm1119, %v1069, -inf
        %v1149 = vmax.f32 %v1147, %v1148
        %v1150 = vrot.slane %v1149, 4
        %v1151 = vmax.f32 %v1149, %v1150
        %v1152 = vrot.slane %v1151, 2
        %v1153 = vmax.f32 %v1151, %v1152
        %v1154 = vrot.slane %v1153, 1
        %v1155 = vmax.f32 %v1153, %v1154
        %v1156 = vsel %vm1119, %v1072, -inf
        %v1157 = vsel %vm1119, %v1075, -inf
        %v1158 = vmax.f32 %v1156, %v1157
        %v1159 = vrot.slane %v1158, 4
        %v1160 = vmax.f32 %v1158, %v1159
        %v1161 = vrot.slane %v1160, 2
        %v1162 = vmax.f32 %v1160, %v1161
        %v1163 = vrot.slane %v1162, 1
        %v1164 = vmax.f32 %v1162, %v1163
        %v1165 = vsel %vm1119, %v1078, -inf
        %v1166 = vsel %vm1119, %v1081, -inf
        %v1167 = vmax.f32 %v1165, %v1166
        %v1168 = vrot.slane %v1167, 4
        %v1169 = vmax.f32 %v1167, %v1168
        %v1170 = vrot.slane %v1169, 2
        %v1171 = vmax.f32 %v1169, %v1170
        %v1172 = vrot.slane %v1171, 1
        %v1173 = vmax.f32 %v1171, %v1172
        %v1174 = vsel %vm1119, %v1084, -inf
        %v1175 = vsel %vm1119, %v1087, -inf
        %v1176 = vmax.f32 %v1174, %v1175
        %v1177 = vrot.slane %v1176, 4
        %v1178 = vmax.f32 %v1176, %v1177
        %v1179 = vrot.slane %v1178, 2
        %v1180 = vmax.f32 %v1178, %v1179
        %v1181 = vrot.slane %v1180, 1
        %v1182 = vmax.f32 %v1180, %v1181
        %v1183 = vsel %vm1119, %v1090, -inf
        %v1184 = vsel %vm1119, %v1093, -inf
        %v1185 = vmax.f32 %v1183, %v1184
        %v1186 = vrot.slane %v1185, 4
        %v1187 = vmax.f32 %v1185, %v1186
        %v1188 = vrot.slane %v1187, 2
        %v1189 = vmax.f32 %v1187, %v1188
        %v1190 = vrot.slane %v1189, 1
        %v1191 = vmax.f32 %v1189, %v1190
        %v1193 = vrot.slane %v1117, 1
        %v1194 = vrot.slane %v1117, 2
        %v1195 = vrot.slane %v1117, 3
        %v1196 = vrot.slane %v1117, 4
        %v1197 = vrot.slane %v1117, 5
        %v1198 = vrot.slane %v1117, 6
        %v1199 = vrot.slane %v1117, 7
        %v1208 = vmax.f32 %v1128, %v1117
        %v1209 = vmax.f32 %v1137, %v1193
        %v1210 = vmax.f32 %v1146, %v1194
        %v1211 = vmax.f32 %v1155, %v1195
        %v1212 = vmax.f32 %v1164, %v1196
        %v1213 = vmax.f32 %v1173, %v1197
        %v1214 = vmax.f32 %v1182, %v1198
        %v1215 = vmax.f32 %v1191, %v1199
        %v1216 = vperm.slane %v1208, 0
        %v1217 = vperm.slane %v1209, 0
        %v1218 = vperm.slane %v1210, 0
        %v1219 = vperm.slane %v1211, 0
        %v1220 = vperm.slane %v1212, 0
        %v1221 = vperm.slane %v1213, 0
        %v1222 = vperm.slane %v1214, 0
        %v1223 = vperm.slane %v1215, 0
        %v1224 = vsub.f32 %v1048, %v1216
        %v1225 = vsub.f32 %v1051, %v1216
        %v1226 = vsub.f32 %v1054, %v1217
        %v1227 = vsub.f32 %v1057, %v1217
        %v1228 = vsub.f32 %v1060, %v1218
        %v1229 = vsub.f32 %v1063, %v1218
        %v1230 = vsub.f32 %v1066, %v1219
        %v1231 = vsub.f32 %v1069, %v1219
        %v1232 = vsub.f32 %v1072, %v1220
        %v1233 = vsub.f32 %v1075, %v1220
        %v1234 = vsub.f32 %v1078, %v1221
        %v1235 = vsub.f32 %v1081, %v1221
        %v1236 = vsub.f32 %v1084, %v1222
        %v1237 = vsub.f32 %v1087, %v1222
        %v1238 = vsub.f32 %v1090, %v1223
        %v1239 = vsub.f32 %v1093, %v1223
        %v1240 = vmul.f32 %v1224, 1.442695
        %v1241 = vpow.pop %v1240
        %v1242 = vmul.f32 %v1225, 1.442695
        %v1243 = vpow.pop %v1242
        %v1244 = vmul.f32 %v1226, 1.442695
        %v1245 = vpow.pop %v1244
        %v1246 = vmul.f32 %v1227, 1.442695
        %v1247 = vpow.pop %v1246
        %v1248 = vmul.f32 %v1228, 1.442695
        %v1249 = vpow.pop %v1248
        %v1250 = vmul.f32 %v1229, 1.442695
        %v1251 = vpow.pop %v1250
        %v1252 = vmul.f32 %v1230, 1.442695
        %v1253 = vpow.pop %v1252
        %v1254 = vmul.f32 %v1231, 1.442695
        %v1255 = vpow.pop %v1254
        %v1256 = vmul.f32 %v1232, 1.442695
        %v1257 = vpow.pop %v1256
        %v1258 = vmul.f32 %v1233, 1.442695
        %v1259 = vpow.pop %v1258
        %v1260 = vmul.f32 %v1234, 1.442695
        %v1261 = vpow.pop %v1260
        %v1262 = vmul.f32 %v1235, 1.442695
        %v1263 = vpow.pop %v1262
        %v1264 = vmul.f32 %v1236, 1.442695
        %v1265 = vpow.pop %v1264
        %v1266 = vmul.f32 %v1237, 1.442695
        %v1267 = vpow.pop %v1266
        %v1268 = vmul.f32 %v1238, 1.442695
        %v1269 = vpow.pop %v1268
        %v1270 = vmul.f32 %v1239, 1.442695
        %v1271 = vpow.pop %v1270
        %v1280 = vrot.slane %v1209, 7
        %v1281 = vsel %vm662, %v1280, %v1208
        %v1282 = vrot.slane %v1210, 6
        %v1283 = vsel %vm665, %v1282, %v1281
        %v1284 = vrot.slane %v1211, 5
        %v1285 = vsel %vm668, %v1284, %v1283
        %v1286 = vrot.slane %v1212, 4
        %v1287 = vsel %vm671, %v1286, %v1285
        %v1288 = vrot.slane %v1213, 3
        %v1289 = vsel %vm674, %v1288, %v1287
        %v1290 = vrot.slane %v1214, 2
        %v1291 = vsel %vm677, %v1290, %v1289
        %v1292 = vrot.slane %v1215, 1
        %v1293 = vsel %vm680, %v1292, %v1291
        %v1295 = vsub.f32 %v1117, %v1293
        %v1296 = vmul.f32 %v1295, 1.442695
        %v1297 = vpow.pop %v1296
        %v1298 = vsel %vm1119, %v1241, 0.0
        %v1299 = vsel %vm1119, %v1243, 0.0
        %v1300 = vadd.f32 %v1298, %v1299
        %v1301 = vrot.slane %v1300, 4
        %v1302 = vadd.f32 %v1300, %v1301
        %v1303 = vrot.slane %v1302, 2
        %v1304 = vadd.f32 %v1302, %v1303
        %v1305 = vrot.slane %v1304, 1
        %v1306 = vadd.f32 %v1304, %v1305
        %v1307 = vsel %vm1119, %v1245, 0.0
        %v1308 = vsel %vm1119, %v1247, 0.0
        %v1309 = vadd.f32 %v1307, %v1308
        %v1310 = vrot.slane %v1309, 4
        %v1311 = vadd.f32 %v1309, %v1310
        %v1312 = vrot.slane %v1311, 2
        %v1313 = vadd.f32 %v1311, %v1312
        %v1314 = vrot.slane %v1313, 1
        %v1315 = vadd.f32 %v1313, %v1314
        %v1316 = vsel %vm1119, %v1249, 0.0
        %v1317 = vsel %vm1119, %v1251, 0.0
        %v1318 = vadd.f32 %v1316, %v1317
        %v1319 = vrot.slane %v1318, 4
        %v1320 = vadd.f32 %v1318, %v1319
        %v1321 = vrot.slane %v1320, 2
        %v1322 = vadd.f32 %v1320, %v1321
        %v1323 = vrot.slane %v1322, 1
        %v1324 = vadd.f32 %v1322, %v1323
        %v1325 = vsel %vm1119, %v1253, 0.0
        %v1326 = vsel %vm1119, %v1255, 0.0
        %v1327 = vadd.f32 %v1325, %v1326
        %v1328 = vrot.slane %v1327, 4
        %v1329 = vadd.f32 %v1327, %v1328
        %v1330 = vrot.slane %v1329, 2
        %v1331 = vadd.f32 %v1329, %v1330
        %v1332 = vrot.slane %v1331, 1
        %v1333 = vadd.f32 %v1331, %v1332
        %v1334 = vsel %vm1119, %v1257, 0.0
        %v1335 = vsel %vm1119, %v1259, 0.0
        %v1336 = vadd.f32 %v1334, %v1335
        %v1337 = vrot.slane %v1336, 4
        %v1338 = vadd.f32 %v1336, %v1337
        %v1339 = vrot.slane %v1338, 2
        %v1340 = vadd.f32 %v1338, %v1339
        %v1341 = vrot.slane %v1340, 1
        %v1342 = vadd.f32 %v1340, %v1341
        %v1343 = vsel %vm1119, %v1261, 0.0
        %v1344 = vsel %vm1119, %v1263, 0.0
        %v1345 = vadd.f32 %v1343, %v1344
        %v1346 = vrot.slane %v1345, 4
        %v1347 = vadd.f32 %v1345, %v1346
        %v1348 = vrot.slane %v1347, 2
        %v1349 = vadd.f32 %v1347, %v1348
        %v1350 = vrot.slane %v1349, 1
        %v1351 = vadd.f32 %v1349, %v1350
        %v1352 = vsel %vm1119, %v1265, 0.0
        %v1353 = vsel %vm1119, %v1267, 0.0
        %v1354 = vadd.f32 %v1352, %v1353
        %v1355 = vrot.slane %v1354, 4
        %v1356 = vadd.f32 %v1354, %v1355
        %v1357 = vrot.slane %v1356, 2
        %v1358 = vadd.f32 %v1356, %v1357
        %v1359 = vrot.slane %v1358, 1
        %v1360 = vadd.f32 %v1358, %v1359
        %v1361 = vsel %vm1119, %v1269, 0.0
        %v1362 = vsel %vm1119, %v1271, 0.0
        %v1363 = vadd.f32 %v1361, %v1362
        %v1364 = vrot.slane %v1363, 4
        %v1365 = vadd.f32 %v1363, %v1364
        %v1366 = vrot.slane %v1365, 2
        %v1367 = vadd.f32 %v1365, %v1366
        %v1368 = vrot.slane %v1367, 1
        %v1369 = vadd.f32 %v1367, %v1368
        %v1371 = vrot.slane %v1297, 1
        %v1372 = vrot.slane %v1297, 2
        %v1373 = vrot.slane %v1297, 3
        %v1374 = vrot.slane %v1297, 4
        %v1375 = vrot.slane %v1297, 5
        %v1376 = vrot.slane %v1297, 6
        %v1377 = vrot.slane %v1297, 7
        %v1386 = vadd.f32 %v1306, %v1297
        %v1387 = vadd.f32 %v1315, %v1371
        %v1388 = vadd.f32 %v1324, %v1372
        %v1389 = vadd.f32 %v1333, %v1373
        %v1390 = vadd.f32 %v1342, %v1374
        %v1391 = vadd.f32 %v1351, %v1375
        %v1392 = vadd.f32 %v1360, %v1376
        %v1393 = vadd.f32 %v1369, %v1377
        %v1394 = vrcp.pop %v1386
        %v1395 = vmul.f32 %v1386, %v1394
        %v1396 = vsub.f32 1.0, %v1395
        %v1397 = vmul.f32 %v1394, %v1396
        %v1398 = vadd.f32 %v1394, %v1397
        %vm1399 = vweird.f32 %v1386
        %vm1400 = vweird.f32 %v1394
        %vm1401 = vmor %vm1399, %vm1400
        %v1402 = vsel %vm1401, %v1394, %v1398
        %v1403 = vand.u32 2147483647, %v1386
        %vm1404 = vcmp.eq.f32.partialorder %v1403, 8.507059e+37
        %v1405 = vand.u32 %v1386, 2147483648
        %v1406 = vor.u32 1.1754944e-38, %v1405
        %v1407 = vsel %vm1404, %v1406, %v1402
        %v1408 = vrcp.pop %v1387
        %v1409 = vmul.f32 %v1387, %v1408
        %v1410 = vsub.f32 1.0, %v1409
        %v1411 = vmul.f32 %v1408, %v1410
        %v1412 = vadd.f32 %v1408, %v1411
        %vm1413 = vweird.f32 %v1387
        %vm1414 = vweird.f32 %v1408
        %vm1415 = vmor %vm1413, %vm1414
        %v1416 = vsel %vm1415, %v1408, %v1412
        %v1417 = vand.u32 2147483647, %v1387
        %vm1418 = vcmp.eq.f32.partialorder %v1417, 8.507059e+37
        %v1419 = vand.u32 %v1387, 2147483648
        %v1420 = vor.u32 1.1754944e-38, %v1419
        %v1421 = vsel %vm1418, %v1420, %v1416
        %v1422 = vrcp.pop %v1388
        %v1423 = vmul.f32 %v1388, %v1422
        %v1424 = vsub.f32 1.0, %v1423
        %v1425 = vmul.f32 %v1422, %v1424
        %v1426 = vadd.f32 %v1422, %v1425
        %vm1427 = vweird.f32 %v1388
        %vm1428 = vweird.f32 %v1422
        %vm1429 = vmor %vm1427, %vm1428
        %v1430 = vsel %vm1429, %v1422, %v1426
        %v1431 = vand.u32 2147483647, %v1388
        %vm1432 = vcmp.eq.f32.partialorder %v1431, 8.507059e+37
        %v1433 = vand.u32 %v1388, 2147483648
        %v1434 = vor.u32 1.1754944e-38, %v1433
        %v1435 = vsel %vm1432, %v1434, %v1430
        %v1436 = vrcp.pop %v1389
        %v1437 = vmul.f32 %v1389, %v1436
        %v1438 = vsub.f32 1.0, %v1437
        %v1439 = vmul.f32 %v1436, %v1438
        %v1440 = vadd.f32 %v1436, %v1439
        %vm1441 = vweird.f32 %v1389
        %vm1442 = vweird.f32 %v1436
        %vm1443 = vmor %vm1441, %vm1442
        %v1444 = vsel %vm1443, %v1436, %v1440
        %v1445 = vand.u32 2147483647, %v1389
        %vm1446 = vcmp.eq.f32.partialorder %v1445, 8.507059e+37
        %v1447 = vand.u32 %v1389, 2147483648
        %v1448 = vor.u32 1.1754944e-38, %v1447
        %v1449 = vsel %vm1446, %v1448, %v1444
        %v1450 = vrcp.pop %v1390
        %v1451 = vmul.f32 %v1390, %v1450
        %v1452 = vsub.f32 1.0, %v1451
        %v1453 = vmul.f32 %v1450, %v1452
        %v1454 = vadd.f32 %v1450, %v1453
        %vm1455 = vweird.f32 %v1390
        %vm1456 = vweird.f32 %v1450
        %vm1457 = vmor %vm1455, %vm1456
        %v1458 = vsel %vm1457, %v1450, %v1454
        %v1459 = vand.u32 2147483647, %v1390
        %vm1460 = vcmp.eq.f32.partialorder %v1459, 8.507059e+37
        %v1461 = vand.u32 %v1390, 2147483648
        %v1462 = vor.u32 1.1754944e-38, %v1461
        %v1463 = vsel %vm1460, %v1462, %v1458
        %v1464 = vrcp.pop %v1391
        %v1465 = vmul.f32 %v1391, %v1464
        %v1466 = vsub.f32 1.0, %v1465
        %v1467 = vmul.f32 %v1464, %v1466
        %v1468 = vadd.f32 %v1464, %v1467
        %vm1469 = vweird.f32 %v1391
        %vm1470 = vweird.f32 %v1464
        %vm1471 = vmor %vm1469, %vm1470
        %v1472 = vsel %vm1471, %v1464, %v1468
        %v1473 = vand.u32 2147483647, %v1391
        %vm1474 = vcmp.eq.f32.partialorder %v1473, 8.507059e+37
        %v1475 = vand.u32 %v1391, 2147483648
        %v1476 = vor.u32 1.1754944e-38, %v1475
        %v1477 = vsel %vm1474, %v1476, %v1472
        %v1478 = vrcp.pop %v1392
        %v1479 = vmul.f32 %v1392, %v1478
        %v1480 = vsub.f32 1.0, %v1479
        %v1481 = vmul.f32 %v1478, %v1480
        %v1482 = vadd.f32 %v1478, %v1481
        %vm1483 = vweird.f32 %v1392
        %vm1484 = vweird.f32 %v1478
        %vm1485 = vmor %vm1483, %vm1484
        %v1486 = vsel %vm1485, %v1478, %v1482
        %v1487 = vand.u32 2147483647, %v1392
        %vm1488 = vcmp.eq.f32.partialorder %v1487, 8.507059e+37
        %v1489 = vand.u32 %v1392, 2147483648
        %v1490 = vor.u32 1.1754944e-38, %v1489
        %v1491 = vsel %vm1488, %v1490, %v1486
        %v1492 = vrcp.pop %v1393
        %v1493 = vmul.f32 %v1393, %v1492
        %v1494 = vsub.f32 1.0, %v1493
        %v1495 = vmul.f32 %v1492, %v1494
        %v1496 = vadd.f32 %v1492, %v1495
        %vm1497 = vweird.f32 %v1393
        %vm1498 = vweird.f32 %v1492
        %vm1499 = vmor %vm1497, %vm1498
        %v1500 = vsel %vm1499, %v1492, %v1496
        %v1501 = vand.u32 2147483647, %v1393
        %vm1502 = vcmp.eq.f32.partialorder %v1501, 8.507059e+37
        %v1503 = vand.u32 %v1393, 2147483648
        %v1504 = vor.u32 1.1754944e-38, %v1503
        %v1505 = vsel %vm1502, %v1504, %v1500
        %v1506 = vperm.slane %v1407, 0
        %v1507 = vperm.slane %v1421, 0
        %v1508 = vperm.slane %v1435, 0
        %v1509 = vperm.slane %v1449, 0
        %v1510 = vperm.slane %v1463, 0
        %v1511 = vperm.slane %v1477, 0
        %v1512 = vperm.slane %v1491, 0
        %v1513 = vperm.slane %v1505, 0
        %v1514 = vmul.f32 %v1241, %v1506
        %v1515 = vmul.f32 %v1243, %v1506
        %v1516 = vmul.f32 %v1245, %v1507
        %v1517 = vmul.f32 %v1247, %v1507
        %v1518 = vmul.f32 %v1249, %v1508
        %v1519 = vmul.f32 %v1251, %v1508
        %v1520 = vmul.f32 %v1253, %v1509
        %v1521 = vmul.f32 %v1255, %v1509
        %v1522 = vmul.f32 %v1257, %v1510
        %v1523 = vmul.f32 %v1259, %v1510
        %v1524 = vmul.f32 %v1261, %v1511
        %v1525 = vmul.f32 %v1263, %v1511
        %v1526 = vmul.f32 %v1265, %v1512
        %v1527 = vmul.f32 %v1267, %v1512
        %v1528 = vmul.f32 %v1269, %v1513
        %v1529 = vmul.f32 %v1271, %v1513
        %v1538 = vrot.slane %v1421, 7
        %v1539 = vsel %vm662, %v1538, %v1407
        %v1540 = vrot.slane %v1435, 6
        %v1541 = vsel %vm665, %v1540, %v1539
        %v1542 = vrot.slane %v1449, 5
        %v1543 = vsel %vm668, %v1542, %v1541
        %v1544 = vrot.slane %v1463, 4
        %v1545 = vsel %vm671, %v1544, %v1543
        %v1546 = vrot.slane %v1477, 3
        %v1547 = vsel %vm674, %v1546, %v1545
        %v1548 = vrot.slane %v1491, 2
        %v1549 = vsel %vm677, %v1548, %v1547
        %v1550 = vrot.slane %v1505, 1
        %v1551 = vsel %vm680, %v1550, %v1549
        %v1553 = vmul.f32 %v1297, %v1551
        %v1554 = vld [vmem:[%s4] sm:$0xf]
        %v1556 = vsel %vm1119, %v1514, 0
        %v1559 = vsel %vm1119, %v1515, 0
        %v1562 = vsel %vm1119, %v1516, 0
        %v1565 = vsel %vm1119, %v1517, 0
        %v1568 = vsel %vm1119, %v1518, 0
        %v1571 = vsel %vm1119, %v1519, 0
        %v1574 = vsel %vm1119, %v1520, 0
        %v1577 = vsel %vm1119, %v1521, 0
        %v1580 = vsel %vm1119, %v1522, 0
        %v1583 = vsel %vm1119, %v1523, 0
        %v1586 = vsel %vm1119, %v1524, 0
        %v1589 = vsel %vm1119, %v1525, 0
        %v1592 = vsel %vm1119, %v1526, 0
        %v1595 = vsel %vm1119, %v1527, 0
        %v1598 = vsel %vm1119, %v1528, 0
        %v1601 = vsel %vm1119, %v1529, 0
        %vm1603 = vcmask 1043456
        %v1605 = vsel %vm1603, %v1554, 0
        %1607 = vmatpush.msra.mxu0 0.0
        %1608 = vmatpush.msra.mxu0 0.0
        %1609 = vmatpush.msra.mxu0 0.0
        %1610 = vmatpush.msra.mxu0 0.0
        %1611 = vmatpush.msra.mxu0 0.0
        %1612 = vmatpush.msra.mxu0 0.0
        %1613 = vmatpush.msra.mxu0 0.0
        %1614 = vmatpush.msra.mxu0 0.0
        %1615 = vmatpush.msra.mxu0 0.0
        %1616 = vmatpush.msra.mxu0 0.0
        %1617 = vmatpush.msra.mxu0 0.0
        %1618 = vmatpush.msra.mxu0 0.0
        %1619 = vmatpush.msra.mxu0 0.0
        %1620 = vmatpush.msra.mxu0 0.0
        %1621 = vmatpush.msra.mxu0 0.0
        %1622 = vmatpush.msra.mxu0 %v1605
        %1623 = vmatmul.f32.gmra.mxu0 %v1556
        %v1624 = vpop.f32.mrf.mxu0
        %v1625 = vadd.f32 0.0, %v1624
        %1626 = vmatmul.f32.gmra.mxu0 %v1559
        %v1627 = vpop.f32.mrf.mxu0
        %v1628 = vadd.f32 0.0, %v1627
        %1629 = vmatmul.f32.gmra.mxu0 %v1562
        %v1630 = vpop.f32.mrf.mxu0
        %v1631 = vadd.f32 0.0, %v1630
        %1632 = vmatmul.f32.gmra.mxu0 %v1565
        %v1633 = vpop.f32.mrf.mxu0
        %v1634 = vadd.f32 0.0, %v1633
        %1635 = vmatmul.f32.gmra.mxu0 %v1568
        %v1636 = vpop.f32.mrf.mxu0
        %v1637 = vadd.f32 0.0, %v1636
        %1638 = vmatmul.f32.gmra.mxu0 %v1571
        %v1639 = vpop.f32.mrf.mxu0
        %v1640 = vadd.f32 0.0, %v1639
        %1641 = vmatmul.f32.gmra.mxu0 %v1574
        %v1642 = vpop.f32.mrf.mxu0
        %v1643 = vadd.f32 0.0, %v1642
        %1644 = vmatmul.f32.gmra.mxu0 %v1577
        %v1645 = vpop.f32.mrf.mxu0
        %v1646 = vadd.f32 0.0, %v1645
        %1647 = vmatmul.f32.gmra.mxu0 %v1580
        %v1648 = vpop.f32.mrf.mxu0
        %v1649 = vadd.f32 0.0, %v1648
        %1650 = vmatmul.f32.gmra.mxu0 %v1583
        %v1651 = vpop.f32.mrf.mxu0
        %v1652 = vadd.f32 0.0, %v1651
        %1653 = vmatmul.f32.gmra.mxu0 %v1586
        %v1654 = vpop.f32.mrf.mxu0
        %v1655 = vadd.f32 0.0, %v1654
        %1656 = vmatmul.f32.gmra.mxu0 %v1589
        %v1657 = vpop.f32.mrf.mxu0
        %v1658 = vadd.f32 0.0, %v1657
        %1659 = vmatmul.f32.gmra.mxu0 %v1592
        %v1660 = vpop.f32.mrf.mxu0
        %v1661 = vadd.f32 0.0, %v1660
        %1662 = vmatmul.f32.gmra.mxu0 %v1595
        %v1663 = vpop.f32.mrf.mxu0
        %v1664 = vadd.f32 0.0, %v1663
        %1665 = vmatmul.f32.gmra.mxu0 %v1598
        %v1666 = vpop.f32.mrf.mxu0
        %v1667 = vadd.f32 0.0, %v1666
        %1668 = vmatmul.f32.gmra.mxu0 %v1601
        %v1669 = vpop.f32.mrf.mxu0
        %v1670 = vadd.f32 0.0, %v1669
        %1671 = vdwg.mxu0
        %v1673 = vsel %vm1119, %v1553, 0
        %1675 = vmatpush.msra.mxu0 0.0
        %1676 = vmatpush.msra.mxu0 0.0
        %1677 = vmatpush.msra.mxu0 0.0
        %1678 = vmatpush.msra.mxu0 0.0
        %1679 = vmatpush.msra.mxu0 0.0
        %1680 = vmatpush.msra.mxu0 0.0
        %1681 = vmatpush.msra.mxu0 0.0
        %1682 = vmatpush.msra.mxu0 0.0
        %1683 = vmatpush.msra.mxu0 0.0
        %1684 = vmatpush.msra.mxu0 0.0
        %1685 = vmatpush.msra.mxu0 0.0
        %1686 = vmatpush.msra.mxu0 0.0
        %1687 = vmatpush.msra.mxu0 0.0
        %1688 = vmatpush.msra.mxu0 0.0
        %1689 = vmatpush.msra.mxu0 0.0
        %1690 = vmatpush.msra.mxu0 %v1605
        %1691 = vmatmul.f32.gmra.mxu0 %v1673
        %v1692 = vpop.f32.mrf.mxu0
        %v1693 = vadd.f32 0.0, %v1692
        %1694 = vdwg.mxu0
        %v1695 = vmul.f32 %v1625, %v891
        %v1696 = vmul.f32 %v1628, %v894
        %v1697 = vmul.f32 %v1631, %v897
        %v1698 = vmul.f32 %v1634, %v900
        %v1699 = vmul.f32 %v1637, %v903
        %v1700 = vmul.f32 %v1640, %v906
        %v1701 = vmul.f32 %v1643, %v909
        %v1702 = vmul.f32 %v1646, %v912
        %v1703 = vmul.f32 %v1649, %v915
        %v1704 = vmul.f32 %v1652, %v918
        %v1705 = vmul.f32 %v1655, %v921
        %v1706 = vmul.f32 %v1658, %v924
        %v1707 = vmul.f32 %v1661, %v927
        %v1708 = vmul.f32 %v1664, %v930
        %v1709 = vmul.f32 %v1667, %v933
        %v1710 = vmul.f32 %v1670, %v936
        %v1711 = vsel %vm527, %v1695, 0.0
        %v1712 = vsel %vm527, %v1696, 0.0
        %v1713 = vadd.f32 %v1711, %v1712
        %v1714 = vrot.slane %v1713, 4
        %v1715 = vadd.f32 %v1713, %v1714
        %v1716 = vrot.slane %v1715, 2
        %v1717 = vadd.f32 %v1715, %v1716
        %v1718 = vrot.slane %v1717, 1
        %v1719 = vadd.f32 %v1717, %v1718
        %v1720 = vsel %vm527, %v1697, 0.0
        %v1721 = vsel %vm527, %v1698, 0.0
        %v1722 = vadd.f32 %v1720, %v1721
        %v1723 = vrot.slane %v1722, 4
        %v1724 = vadd.f32 %v1722, %v1723
        %v1725 = vrot.slane %v1724, 2
        %v1726 = vadd.f32 %v1724, %v1725
        %v1727 = vrot.slane %v1726, 1
        %v1728 = vadd.f32 %v1726, %v1727
        %v1729 = vsel %vm527, %v1699, 0.0
        %v1730 = vsel %vm527, %v1700, 0.0
        %v1731 = vadd.f32 %v1729, %v1730
        %v1732 = vrot.slane %v1731, 4
        %v1733 = vadd.f32 %v1731, %v1732
        %v1734 = vrot.slane %v1733, 2
        %v1735 = vadd.f32 %v1733, %v1734
        %v1736 = vrot.slane %v1735, 1
        %v1737 = vadd.f32 %v1735, %v1736
        %v1738 = vsel %vm527, %v1701, 0.0
        %v1739 = vsel %vm527, %v1702, 0.0
        %v1740 = vadd.f32 %v1738, %v1739
        %v1741 = vrot.slane %v1740, 4
        %v1742 = vadd.f32 %v1740, %v1741
        %v1743 = vrot.slane %v1742, 2
        %v1744 = vadd.f32 %v1742, %v1743
        %v1745 = vrot.slane %v1744, 1
        %v1746 = vadd.f32 %v1744, %v1745
        %v1747 = vsel %vm527, %v1703, 0.0
        %v1748 = vsel %vm527, %v1704, 0.0
        %v1749 = vadd.f32 %v1747, %v1748
        %v1750 = vrot.slane %v1749, 4
        %v1751 = vadd.f32 %v1749, %v1750
        %v1752 = vrot.slane %v1751, 2
        %v1753 = vadd.f32 %v1751, %v1752
        %v1754 = vrot.slane %v1753, 1
        %v1755 = vadd.f32 %v1753, %v1754
        %v1756 = vsel %vm527, %v1705, 0.0
        %v1757 = vsel %vm527, %v1706, 0.0
        %v1758 = vadd.f32 %v1756, %v1757
        %v1759 = vrot.slane %v1758, 4
        %v1760 = vadd.f32 %v1758, %v1759
        %v1761 = vrot.slane %v1760, 2
        %v1762 = vadd.f32 %v1760, %v1761
        %v1763 = vrot.slane %v1762, 1
        %v1764 = vadd.f32 %v1762, %v1763
        %v1765 = vsel %vm527, %v1707, 0.0
        %v1766 = vsel %vm527, %v1708, 0.0
        %v1767 = vadd.f32 %v1765, %v1766
        %v1768 = vrot.slane %v1767, 4
        %v1769 = vadd.f32 %v1767, %v1768
        %v1770 = vrot.slane %v1769, 2
        %v1771 = vadd.f32 %v1769, %v1770
        %v1772 = vrot.slane %v1771, 1
        %v1773 = vadd.f32 %v1771, %v1772
        %v1774 = vsel %vm527, %v1709, 0.0
        %v1775 = vsel %vm527, %v1710, 0.0
        %v1776 = vadd.f32 %v1774, %v1775
        %v1777 = vrot.slane %v1776, 4
        %v1778 = vadd.f32 %v1776, %v1777
        %v1779 = vrot.slane %v1778, 2
        %v1780 = vadd.f32 %v1778, %v1779
        %v1781 = vrot.slane %v1780, 1
        %v1782 = vadd.f32 %v1780, %v1781
        %v1783 = vmul.f32 %v1693, %v758
        %v1785 = vrot.slane %v1783, 1
        %v1786 = vrot.slane %v1783, 2
        %v1787 = vrot.slane %v1783, 3
        %v1788 = vrot.slane %v1783, 4
        %v1789 = vrot.slane %v1783, 5
        %v1790 = vrot.slane %v1783, 6
        %v1791 = vrot.slane %v1783, 7
        %v1800 = vadd.f32 %v1719, %v1783
        %v1801 = vadd.f32 %v1728, %v1785
        %v1802 = vadd.f32 %v1737, %v1786
        %v1803 = vadd.f32 %v1746, %v1787
        %v1804 = vadd.f32 %v1755, %v1788
        %v1805 = vadd.f32 %v1764, %v1789
        %v1806 = vadd.f32 %v1773, %v1790
        %v1807 = vadd.f32 %v1782, %v1791
        %v1808 = vld [vmem:[%s11] sm:$0xff]
        %v1809 = vld [vmem:[%s11 + $0x8] sm:$0xff]
        %v1810 = vld [vmem:[%s11 + $0x10] sm:$0xff]
        %v1811 = vld [vmem:[%s11 + $0x18] sm:$0xff]
        %v1812 = vld [vmem:[%s12] sm:$0x1]
        %v1814 = vperm.slane %v1812, 0
        %v1824 = vrot.slane %v1801, 7
        %v1825 = vsel %vm662, %v1824, %v1800
        %v1826 = vrot.slane %v1802, 6
        %v1827 = vsel %vm665, %v1826, %v1825
        %v1828 = vrot.slane %v1803, 5
        %v1829 = vsel %vm668, %v1828, %v1827
        %v1830 = vrot.slane %v1804, 4
        %v1831 = vsel %vm671, %v1830, %v1829
        %v1832 = vrot.slane %v1805, 3
        %v1833 = vsel %vm674, %v1832, %v1831
        %v1834 = vrot.slane %v1806, 2
        %v1835 = vsel %vm677, %v1834, %v1833
        %v1836 = vrot.slane %v1807, 1
        %v1837 = vsel %vm680, %v1836, %v1835
        %v1838 = vsel %vm527, %v1837, 0
        %1840 = vmatpush.msra.mxu0 0.0
        %1841 = vmatpush.msra.mxu0 0.0
        %1842 = vmatpush.msra.mxu0 0.0
        %1843 = vmatpush.msra.mxu0 0.0
        %1844 = vmatpush.msra.mxu0 0.0
        %1845 = vmatpush.msra.mxu0 0.0
        %1846 = vmatpush.msra.mxu0 0.0
        %1847 = vmatpush.msra.mxu0 0.0
        %1848 = vmatpush.msra.mxu0 0.0
        %1849 = vmatpush.msra.mxu0 0.0
        %1850 = vmatpush.msra.mxu0 0.0
        %1851 = vmatpush.msra.mxu0 0.0
        %1852 = vmatpush.msra.mxu0 %v1811
        %1853 = vmatpush.msra.mxu0 %v1810
        %1854 = vmatpush.msra.mxu0 %v1809
        %1855 = vmatpush.msra.mxu0 %v1808
        %1856 = vmatmul.f32.gmra.mxu0 %v1838
        %v1857 = vpop.f32.mrf.mxu0
        %v1858 = vadd.f32 %v1814, %v1857
        %1859 = vdwg.mxu0
        %vm1860 = vcmask 130048
        %1861 = vst.msk [vmem:[%s509] sm:$0xff] %vm1860, %v1858
        %s1862 = sand.u32 %s318, 1
        %s1863 = scalar_lea.sflag [#allocation4], %s1862
        %s1864 = sand.u32 %s318, 1
        %s1865 = smul.addr %s1864, 8
        %s1866 = scalar_lea.vmem [#allocation10], %s1865
        // Predicated region
        $region89: #{tpu_custom_call.1} parent=71 // pred_check
          %p1867 = pneg %p328
        $region90: #{tpu_custom_call.1} parent=71 // pred_check_branch
          %1869 = sbr.rel (%p1867) target = $region92
        $region91: #{tpu_custom_call.1} parent=71 // pred_region
          %1871 = vsyncadd %s1863, 0
          %s1872 = smul.addr %s32, 8
          %s1873 = scalar_lea.hbm %s13, %s1872
          %s1875 = sshll.u32 %s1866, 4
          %s1876 = int_to_ptr.vmem [resolvable:$true] %s1875
          %s1877 = sshll.u32 %s1873, 4
          %s1878 = int_to_ptr.hbm [resolvable:$true] %s1877
          %1880 = dma.vmem_to_hbm [thread:$0]  %s1876, 128, %s1878, %s1863
        $region92: #{tpu_custom_call.1} parent=71 // pred_fallthru
          _
      $region72: #{tpu_custom_call.1} parent=5 // pred_fallthru
        _
      %p1881 = scmp.le.s32.totalorder 2, %s27
      // Predicated region
      $region93: #{tpu_custom_call.1} parent=5 // pred_check
        %p1882 = pneg %p1881
      $region94: #{tpu_custom_call.1} parent=5 // pred_check_branch
        %1884 = sbr.rel (%p1882) target = $region96
      $region95: #{tpu_custom_call.1} parent=5 // pred_region
        %s1885 = ssub.s32 %s27, 2
        // Predicated region
        $region97: #{tpu_custom_call.1} parent=95 // pred_check
          %p1886 = pneg %p334
        $region98: #{tpu_custom_call.1} parent=95 // pred_check_branch
          %1888 = sbr.rel (%p1886) target = $region100
        $region99: #{tpu_custom_call.1} parent=95 // pred_region
          %s1889 = sand.u32 %s319, 1
          %s1890 = scalar_lea.sflag [#allocation4], %s1889
          %s1891 = sand.u32 %s319, 1
          %s1892 = smul.addr %s1891, 8
          %s1893 = scalar_lea.vmem [#allocation10], %s1892
          %1895 = dma.done %s1890, 128
        $region100: #{tpu_custom_call.1} parent=95 // pred_fallthru
          _
      $region96: #{tpu_custom_call.1} parent=5 // pred_fallthru
        _
    $region6: #{tpu_custom_call.1} parent=1 // loop_footer
      %s31 = sadd.s32 1, %s27
    $region7: #{tpu_custom_call.1} parent=1 // loop_footer_branch
      %26 = sbr.rel target = $region3
    $region8: #{tpu_custom_call.1} parent=1 // loop_exit
      _
    %1896 = vsyncpa [#allocation3], 1
    %s1897 = scalar_lea.sflag [#allocation3], 1
    %1898 = vsyncpa %s1897, 1
    %1899 = vsyncpa [#allocation6], 1
    %1900 = vsyncpa [#allocation9], 1
    %1901 = vsyncpa [#allocation4], 1
    %s1902 = scalar_lea.sflag [#allocation4], 1
    %1903 = vsyncpa %s1902, 1

</llo_original>
